<compile_context>
chip_gen: v7x
topology: tpu7x:2x2x1
jax: 0.10.0
libtpu: 0.0.40
codegen_flags: <defaults>
</compile_context>

<pallas_src>
import functools
import math

import jax
import jax.numpy as jnp
from jax import lax
from jax.experimental import pallas as pl
from jax.experimental.pallas import tpu as pltpu


def _mhca_kernel(x_ref, w_ref, o_ref, *, num_heads, head_dim):
    # x_ref: (B, T, E)        whole batch, one block
    # w_ref: (E, 3*H*E)       fused [Wq*scale | Wk | Wv], lane-dense, resident
    # o_ref: (B, T, H*E)      output in concat(dim=-1) layout
    B, T, E = x_ref.shape
    H = num_heads
    HE = H * head_dim

    dt = x_ref.dtype
    x2 = x_ref[...].reshape(B * T, E)        # merge leading dims only (cheap)
    w = w_ref[...]

    # Fused QKV projection for all heads / batches in one lane-dense matmul.
    # f32 accumulation on the MXU; scale for q already folded into the weights.
    qkv = jnp.dot(x2, w, preferred_element_type=jnp.float32)   # (B*T, 3*HE)
    # Back to the compute dtype so the attention matmuls get native operands.
    qkv = qkv.astype(dt)

    # Causal mask shared by all heads and batches: (1, T, T), True above diag.
    row = lax.broadcasted_iota(jnp.int32, (T, T), 0)
    col = lax.broadcasted_iota(jnp.int32, (T, T), 1)
    causal = (col > row)[None]               # (1, T, T) broadcasts over B
    neg = jnp.float32(-1e30)                 # finite large-negative (robust)

    ctxs = []
    for h in range(H):                       # H small & static -> unrolled
        lo = h * head_dim
        q = qkv[:, lo:lo + head_dim].reshape(B, T, head_dim)
        k = qkv[:, HE + lo:HE + lo + head_dim].reshape(B, T, head_dim)
        v = qkv[:, 2 * HE + lo:2 * HE + lo + head_dim].reshape(B, T, head_dim)

        # Scores for all batch rows at once (leading-batch einsum).
        s = jnp.einsum('btd,bsd->bts', q, k,
                       preferred_element_type=jnp.float32)      # (B, T, T)
        s = jnp.where(causal, neg, s)

        # Softmax in f32; diagonal is never masked so rows are never all-masked.
        m = jnp.max(s, axis=-1, keepdims=True)
        p = jnp.exp(s - m)
        denom = jnp.sum(p, axis=-1, keepdims=True)
        attn = (p * pl.reciprocal(denom, approx=True)).astype(dt)

        ctxs.append(jnp.einsum('bts,bsd->btd', attn, v,
                               preferred_element_type=jnp.float32))  # (B,T,E)

    # Single lane-dense (B, T, H*E) store in the final concat layout.
    o_ref[...] = jnp.concatenate(ctxs, axis=-1).astype(o_ref.dtype)


def prepare_qkv_weights(wq, wk, wv):
    """One-time parameter prep (NOT per forward call).

    wq/wk/wv: (H, E, E) in nn.Linear (out, in) layout.
    Returns (E, 3*H*E): columns [ Wq.T * 1/sqrt(E) | Wk.T | Wv.T ], head-major.
    """
    H, E_out, E_in = wq.shape
    scale = 1.0 / math.sqrt(E_out)           # keys.shape[-1] ** 0.5 in the module

    def stack(w):                             # (H, out, in) -> (in, H*out)
        return jnp.transpose(w, (2, 0, 1)).reshape(E_in, H * E_out)

    return jnp.concatenate([stack(wq) * scale, stack(wk), stack(wv)], axis=1)


def multi_head_causal_attention(x, w_all, *, num_heads, head_dim):
    """x: (B, T, E); w_all: (E, 3*H*E) from prepare_qkv_weights.

    Returns (B, T, H*E), matching torch.cat([head(x) for head in heads], -1).
    """
    B, T, E = x.shape
    HE = num_heads * head_dim

    itemsize = jnp.dtype(x.dtype).itemsize
    flops = (2 * (B * T) * E * 3 * HE                 # fused QKV projection
             + B * num_heads * 2 * T * T * head_dim   # q @ k.T
             + B * num_heads * 2 * T * T * head_dim)  # attn @ v
    bytes_accessed = (B * T * E * itemsize
                      + E * 3 * HE * itemsize
                      + B * T * HE * itemsize)
    cost = pl.CostEstimate(flops=flops,
                           transcendentals=B * num_heads * T * T,
                           bytes_accessed=bytes_accessed)

    kernel = functools.partial(_mhca_kernel, num_heads=num_heads,
                               head_dim=head_dim)

    return pl.pallas_call(
        kernel,
        out_shape=jax.ShapeDtypeStruct((B, T, HE), x.dtype),
        grid_spec=pltpu.PrefetchScalarGridSpec(
            num_scalar_prefetch=0,
            grid=(1,),                                   # single step: overhead paid once
            in_specs=[
                pl.BlockSpec((B, T, E), lambda i: (0, 0, 0)),       # whole batch
                pl.BlockSpec((E, 3 * HE), lambda i: (0, 0)),        # resident weights
            ],
            out_specs=pl.BlockSpec((B, T, HE), lambda i: (0, 0, 0)),
        ),
        compiler_params=pltpu.CompilerParams(
            dimension_semantics=("arbitrary",),
        ),
        cost_estimate=cost,
    )(x, w_all)


def _reference(x, wq, wk, wv):
    """Pure-JAX reference matching the PyTorch forward."""
    B, T, E = x.shape
    outs = []
    mask = jnp.triu(jnp.ones((T, T), dtype=bool), k=1)
    for h in range(wq.shape[0]):
        q = x @ wq[h].T
        k = x @ wk[h].T
        v = x @ wv[h].T
        s = q @ jnp.swapaxes(k, 1, 2)
        s = jnp.where(mask[None], -jnp.inf, s)
        a = jax.nn.softmax(s / math.sqrt(E), axis=-1)
        outs.append(a @ v)
    return jnp.concatenate(outs, axis=-1)


if __name__ == "__main__":
    # Small shapes consistent with the module.
    numberOfHeads = 4
    embeddingDimension = 32
    contextLength = 16
    batch = 2
    numberOfTokens = 8  # <= contextLength

    key = jax.random.PRNGKey(0)
    kx, kq, kk, kv = jax.random.split(key, 4)

    x = jax.random.normal(kx, (batch, numberOfTokens, embeddingDimension),
                          dtype=jnp.float32)
    # Deterministic nn.Linear-like init, one (E, E) matrix per head, (out, in).
    scale = 1.0 / math.sqrt(embeddingDimension)
    wq = jax.random.uniform(kq, (numberOfHeads, embeddingDimension, embeddingDimension),
                            minval=-scale, maxval=scale, dtype=jnp.float32)
    wk = jax.random.uniform(kk, (numberOfHeads, embeddingDimension, embeddingDimension),
                            minval=-scale, maxval=scale, dtype=jnp.float32)
    wv = jax.random.uniform(kv, (numberOfHeads, embeddingDimension, embeddingDimension),
                            minval=-scale, maxval=scale, dtype=jnp.float32)

    # One-time weight prep (outside the per-call path).
    w_all = prepare_qkv_weights(wq, wk, wv)

    out = multi_head_causal_attention(x, w_all,
                                      num_heads=numberOfHeads,
                                      head_dim=embeddingDimension)
    out = jax.block_until_ready(out)

    ref = _reference(x, wq, wk, wv)
    assert out.shape == (batch, numberOfTokens,
                         numberOfHeads * embeddingDimension)
    # Tolerance slightly loosened vs the pure-f32 reference because the softmax
    # denominator uses the EUP approximate reciprocal.
    assert jnp.allclose(out, ref, atol=5e-3, rtol=5e-3), "mismatch vs reference"

    print("KERNEL_OK")
</pallas_src>

<mosaic_0001>
module attributes {stable_mosaic.version = 11 : i64} {
  func.func @_mhca_kernel(%arg0: i32, %arg1: memref<2x8x32xf32, #tpu.memory_space<vmem>>, %arg2: memref<32x384xf32, #tpu.memory_space<vmem>>, %arg3: memref<2x8x128xf32, #tpu.memory_space<vmem>>) attributes {dimension_semantics = [#tpu.dimension_semantics<arbitrary>], iteration_bounds = array<i64: 1>, scalar_prefetch = 0 : i64, scratch_operands = 0 : i64, tpu.core_type = #tpu.core_type<tc>, window_params = [{pipeline_mode = #tpu.pipeline_mode<synchronous>, transform_indices = @transform_0, window_bounds = array<i64: 2, 8, 32>}, {pipeline_mode = #tpu.pipeline_mode<synchronous>, transform_indices = @transform_1, window_bounds = array<i64: 32, 384>}, {pipeline_mode = #tpu.pipeline_mode<synchronous>, transform_indices = @transform_2, window_bounds = array<i64: 2, 8, 128>}]} {
    %c0 = arith.constant 0 : index
    %c0_0 = arith.constant 0 : index
    %c0_1 = arith.constant 0 : index
    %0 = vector.load %arg1[%c0, %c0_0, %c0_1] : memref<2x8x32xf32, #tpu.memory_space<vmem>>, vector<2x8x32xf32>
    %1 = vector.shape_cast %0 : vector<2x8x32xf32> to vector<16x32xf32>
    %c0_2 = arith.constant 0 : index
    %c0_3 = arith.constant 0 : index
    %2 = vector.load %arg2[%c0_2, %c0_3] : memref<32x384xf32, #tpu.memory_space<vmem>>, vector<32x384xf32>
    %cst = arith.constant dense<0.000000e+00> : vector<16x384xf32>
    %3 = tpu.matmul %1, %2, %cst {dimension_numbers = #tpu.dot_dimension_numbers<[1], [0], [0], [1], [0, 0, 1, 1], [], []>} : vector<16x32xf32>, vector<32x384xf32>, vector<16x384xf32> -> vector<16x384xf32>
    %4 = tpu.iota {dimensions = array<i32: 0>} : vector<8x8xi32>
    %5 = tpu.iota {dimensions = array<i32: 1>} : vector<8x8xi32>
    %6 = arith.cmpi sgt, %5, %4 : vector<8x8xi32>
    %7 = vector.shape_cast %6 : vector<8x8xi1> to vector<1x8x8xi1>
    %8 = vector.extract_strided_slice %3 {offsets = [0, 0], sizes = [16, 32], strides = [1, 1]} : vector<16x384xf32> to vector<16x32xf32>
    %9 = vector.shape_cast %8 : vector<16x32xf32> to vector<2x8x32xf32>
    %10 = vector.extract_strided_slice %3 {offsets = [0, 128], sizes = [16, 32], strides = [1, 1]} : vector<16x384xf32> to vector<16x32xf32>
    %11 = vector.shape_cast %10 : vector<16x32xf32> to vector<2x8x32xf32>
    %12 = vector.extract_strided_slice %3 {offsets = [0, 256], sizes = [16, 32], strides = [1, 1]} : vector<16x384xf32> to vector<16x32xf32>
    %13 = vector.shape_cast %12 : vector<16x32xf32> to vector<2x8x32xf32>
    "tpu.trace_start"() <{level = 10 : i32, message = "btd,bsd->bts"}> : () -> ()
    %cst_4 = arith.constant dense<0.000000e+00> : vector<2x8x8xf32>
    %14 = tpu.matmul %9, %11, %cst_4 {dimension_numbers = #tpu.dot_dimension_numbers<[2], [2], [1], [1], [0, 0, 0, 1, 1, 1], [0], [0]>} : vector<2x8x32xf32>, vector<2x8x32xf32>, vector<2x8x8xf32> -> vector<2x8x8xf32>
    %cst_5 = arith.constant -1.000000e+30 : f32
    "tpu.trace_stop"() : () -> ()
    %15 = vector.shape_cast %7 : vector<1x8x8xi1> to vector<1x8x8xi1>
    %16 = vector.broadcast %15 : vector<1x8x8xi1> to vector<2x8x8xi1>
    %17 = vector.broadcast %cst_5 : f32 to vector<2x8x8xf32>
    %18 = arith.select %16, %17, %14 : vector<2x8x8xi1>, vector<2x8x8xf32>
    %cst_6 = arith.constant dense<0xFF800000> : vector<2x8xf32>
    %19 = vector.multi_reduction <maximumf>, %18, %cst_6 [2] : vector<2x8x8xf32> to vector<2x8xf32>
    %20 = vector.shape_cast %19 : vector<2x8xf32> to vector<2x8x1xf32>
    %21 = vector.broadcast %20 : vector<2x8x1xf32> to vector<2x8x8xf32>
    %22 = arith.subf %18, %21 : vector<2x8x8xf32>
    %23 = math.exp %22 : vector<2x8x8xf32>
    %cst_7 = arith.constant dense<0.000000e+00> : vector<2x8xf32>
    %24 = vector.multi_reduction <add>, %23, %cst_7 [2] : vector<2x8x8xf32> to vector<2x8xf32>
    %25 = vector.shape_cast %24 : vector<2x8xf32> to vector<2x8x1xf32>
    %26 = tpu.reciprocal %25 {approx = true} : vector<2x8x1xf32> -> vector<2x8x1xf32>
    %27 = vector.broadcast %26 : vector<2x8x1xf32> to vector<2x8x8xf32>
    %28 = arith.mulf %23, %27 : vector<2x8x8xf32>
    "tpu.trace_start"() <{level = 10 : i32, message = "bts,bsd->btd"}> : () -> ()
    %cst_8 = arith.constant dense<0.000000e+00> : vector<2x8x32xf32>
    %29 = tpu.matmul %28, %13, %cst_8 {dimension_numbers = #tpu.dot_dimension_numbers<[2], [1], [1], [2], [0, 0, 0, 1, 1, 2], [0], [0]>} : vector<2x8x8xf32>, vector<2x8x32xf32>, vector<2x8x32xf32> -> vector<2x8x32xf32>
    "tpu.trace_stop"() : () -> ()
    %30 = vector.extract_strided_slice %3 {offsets = [0, 32], sizes = [16, 32], strides = [1, 1]} : vector<16x384xf32> to vector<16x32xf32>
    %31 = vector.shape_cast %30 : vector<16x32xf32> to vector<2x8x32xf32>
    %32 = vector.extract_strided_slice %3 {offsets = [0, 160], sizes = [16, 32], strides = [1, 1]} : vector<16x384xf32> to vector<16x32xf32>
    %33 = vector.shape_cast %32 : vector<16x32xf32> to vector<2x8x32xf32>
    %34 = vector.extract_strided_slice %3 {offsets = [0, 288], sizes = [16, 32], strides = [1, 1]} : vector<16x384xf32> to vector<16x32xf32>
    %35 = vector.shape_cast %34 : vector<16x32xf32> to vector<2x8x32xf32>
    "tpu.trace_start"() <{level = 10 : i32, message = "btd,bsd->bts"}> : () -> ()
    %cst_9 = arith.constant dense<0.000000e+00> : vector<2x8x8xf32>
    %36 = tpu.matmul %31, %33, %cst_9 {dimension_numbers = #tpu.dot_dimension_numbers<[2], [2], [1], [1], [0, 0, 0, 1, 1, 1], [0], [0]>} : vector<2x8x32xf32>, vector<2x8x32xf32>, vector<2x8x8xf32> -> vector<2x8x8xf32>
    %cst_10 = arith.constant -1.000000e+30 : f32
    "tpu.trace_stop"() : () -> ()
    %37 = vector.shape_cast %7 : vector<1x8x8xi1> to vector<1x8x8xi1>
    %38 = vector.broadcast %37 : vector<1x8x8xi1> to vector<2x8x8xi1>
    %39 = vector.broadcast %cst_10 : f32 to vector<2x8x8xf32>
    %40 = arith.select %38, %39, %36 : vector<2x8x8xi1>, vector<2x8x8xf32>
    %cst_11 = arith.constant dense<0xFF800000> : vector<2x8xf32>
    %41 = vector.multi_reduction <maximumf>, %40, %cst_11 [2] : vector<2x8x8xf32> to vector<2x8xf32>
    %42 = vector.shape_cast %41 : vector<2x8xf32> to vector<2x8x1xf32>
    %43 = vector.broadcast %42 : vector<2x8x1xf32> to vector<2x8x8xf32>
    %44 = arith.subf %40, %43 : vector<2x8x8xf32>
    %45 = math.exp %44 : vector<2x8x8xf32>
    %cst_12 = arith.constant dense<0.000000e+00> : vector<2x8xf32>
    %46 = vector.multi_reduction <add>, %45, %cst_12 [2] : vector<2x8x8xf32> to vector<2x8xf32>
    %47 = vector.shape_cast %46 : vector<2x8xf32> to vector<2x8x1xf32>
    %48 = tpu.reciprocal %47 {approx = true} : vector<2x8x1xf32> -> vector<2x8x1xf32>
    %49 = vector.broadcast %48 : vector<2x8x1xf32> to vector<2x8x8xf32>
    %50 = arith.mulf %45, %49 : vector<2x8x8xf32>
    "tpu.trace_start"() <{level = 10 : i32, message = "bts,bsd->btd"}> : () -> ()
    %cst_13 = arith.constant dense<0.000000e+00> : vector<2x8x32xf32>
    %51 = tpu.matmul %50, %35, %cst_13 {dimension_numbers = #tpu.dot_dimension_numbers<[2], [1], [1], [2], [0, 0, 0, 1, 1, 2], [0], [0]>} : vector<2x8x8xf32>, vector<2x8x32xf32>, vector<2x8x32xf32> -> vector<2x8x32xf32>
    "tpu.trace_stop"() : () -> ()
    %52 = vector.extract_strided_slice %3 {offsets = [0, 64], sizes = [16, 32], strides = [1, 1]} : vector<16x384xf32> to vector<16x32xf32>
    %53 = vector.shape_cast %52 : vector<16x32xf32> to vector<2x8x32xf32>
    %54 = vector.extract_strided_slice %3 {offsets = [0, 192], sizes = [16, 32], strides = [1, 1]} : vector<16x384xf32> to vector<16x32xf32>
    %55 = vector.shape_cast %54 : vector<16x32xf32> to vector<2x8x32xf32>
    %56 = vector.extract_strided_slice %3 {offsets = [0, 320], sizes = [16, 32], strides = [1, 1]} : vector<16x384xf32> to vector<16x32xf32>
    %57 = vector.shape_cast %56 : vector<16x32xf32> to vector<2x8x32xf32>
    "tpu.trace_start"() <{level = 10 : i32, message = "btd,bsd->bts"}> : () -> ()
    %cst_14 = arith.constant dense<0.000000e+00> : vector<2x8x8xf32>
    %58 = tpu.matmul %53, %55, %cst_14 {dimension_numbers = #tpu.dot_dimension_numbers<[2], [2], [1], [1], [0, 0, 0, 1, 1, 1], [0], [0]>} : vector<2x8x32xf32>, vector<2x8x32xf32>, vector<2x8x8xf32> -> vector<2x8x8xf32>
    %cst_15 = arith.constant -1.000000e+30 : f32
    "tpu.trace_stop"() : () -> ()
    %59 = vector.shape_cast %7 : vector<1x8x8xi1> to vector<1x8x8xi1>
    %60 = vector.broadcast %59 : vector<1x8x8xi1> to vector<2x8x8xi1>
    %61 = vector.broadcast %cst_15 : f32 to vector<2x8x8xf32>
    %62 = arith.select %60, %61, %58 : vector<2x8x8xi1>, vector<2x8x8xf32>
    %cst_16 = arith.constant dense<0xFF800000> : vector<2x8xf32>
    %63 = vector.multi_reduction <maximumf>, %62, %cst_16 [2] : vector<2x8x8xf32> to vector<2x8xf32>
    %64 = vector.shape_cast %63 : vector<2x8xf32> to vector<2x8x1xf32>
    %65 = vector.broadcast %64 : vector<2x8x1xf32> to vector<2x8x8xf32>
    %66 = arith.subf %62, %65 : vector<2x8x8xf32>
    %67 = math.exp %66 : vector<2x8x8xf32>
    %cst_17 = arith.constant dense<0.000000e+00> : vector<2x8xf32>
    %68 = vector.multi_reduction <add>, %67, %cst_17 [2] : vector<2x8x8xf32> to vector<2x8xf32>
    %69 = vector.shape_cast %68 : vector<2x8xf32> to vector<2x8x1xf32>
    %70 = tpu.reciprocal %69 {approx = true} : vector<2x8x1xf32> -> vector<2x8x1xf32>
    %71 = vector.broadcast %70 : vector<2x8x1xf32> to vector<2x8x8xf32>
    %72 = arith.mulf %67, %71 : vector<2x8x8xf32>
    "tpu.trace_start"() <{level = 10 : i32, message = "bts,bsd->btd"}> : () -> ()
    %cst_18 = arith.constant dense<0.000000e+00> : vector<2x8x32xf32>
    %73 = tpu.matmul %72, %57, %cst_18 {dimension_numbers = #tpu.dot_dimension_numbers<[2], [1], [1], [2], [0, 0, 0, 1, 1, 2], [0], [0]>} : vector<2x8x8xf32>, vector<2x8x32xf32>, vector<2x8x32xf32> -> vector<2x8x32xf32>
    "tpu.trace_stop"() : () -> ()
    %74 = vector.extract_strided_slice %3 {offsets = [0, 96], sizes = [16, 32], strides = [1, 1]} : vector<16x384xf32> to vector<16x32xf32>
    %75 = vector.shape_cast %74 : vector<16x32xf32> to vector<2x8x32xf32>
    %76 = vector.extract_strided_slice %3 {offsets = [0, 224], sizes = [16, 32], strides = [1, 1]} : vector<16x384xf32> to vector<16x32xf32>
    %77 = vector.shape_cast %76 : vector<16x32xf32> to vector<2x8x32xf32>
    %78 = vector.extract_strided_slice %3 {offsets = [0, 352], sizes = [16, 32], strides = [1, 1]} : vector<16x384xf32> to vector<16x32xf32>
    %79 = vector.shape_cast %78 : vector<16x32xf32> to vector<2x8x32xf32>
    "tpu.trace_start"() <{level = 10 : i32, message = "btd,bsd->bts"}> : () -> ()
    %cst_19 = arith.constant dense<0.000000e+00> : vector<2x8x8xf32>
    %80 = tpu.matmul %75, %77, %cst_19 {dimension_numbers = #tpu.dot_dimension_numbers<[2], [2], [1], [1], [0, 0, 0, 1, 1, 1], [0], [0]>} : vector<2x8x32xf32>, vector<2x8x32xf32>, vector<2x8x8xf32> -> vector<2x8x8xf32>
    %cst_20 = arith.constant -1.000000e+30 : f32
    "tpu.trace_stop"() : () -> ()
    %81 = vector.shape_cast %7 : vector<1x8x8xi1> to vector<1x8x8xi1>
    %82 = vector.broadcast %81 : vector<1x8x8xi1> to vector<2x8x8xi1>
    %83 = vector.broadcast %cst_20 : f32 to vector<2x8x8xf32>
    %84 = arith.select %82, %83, %80 : vector<2x8x8xi1>, vector<2x8x8xf32>
    %cst_21 = arith.constant dense<0xFF800000> : vector<2x8xf32>
    %85 = vector.multi_reduction <maximumf>, %84, %cst_21 [2] : vector<2x8x8xf32> to vector<2x8xf32>
    %86 = vector.shape_cast %85 : vector<2x8xf32> to vector<2x8x1xf32>
    %87 = vector.broadcast %86 : vector<2x8x1xf32> to vector<2x8x8xf32>
    %88 = arith.subf %84, %87 : vector<2x8x8xf32>
    %89 = math.exp %88 : vector<2x8x8xf32>
    %cst_22 = arith.constant dense<0.000000e+00> : vector<2x8xf32>
    %90 = vector.multi_reduction <add>, %89, %cst_22 [2] : vector<2x8x8xf32> to vector<2x8xf32>
    %91 = vector.shape_cast %90 : vector<2x8xf32> to vector<2x8x1xf32>
    %92 = tpu.reciprocal %91 {approx = true} : vector<2x8x1xf32> -> vector<2x8x1xf32>
    %93 = vector.broadcast %92 : vector<2x8x1xf32> to vector<2x8x8xf32>
    %94 = arith.mulf %89, %93 : vector<2x8x8xf32>
    "tpu.trace_start"() <{level = 10 : i32, message = "bts,bsd->btd"}> : () -> ()
    %cst_23 = arith.constant dense<0.000000e+00> : vector<2x8x32xf32>
    %95 = tpu.matmul %94, %79, %cst_23 {dimension_numbers = #tpu.dot_dimension_numbers<[2], [1], [1], [2], [0, 0, 0, 1, 1, 2], [0], [0]>} : vector<2x8x8xf32>, vector<2x8x32xf32>, vector<2x8x32xf32> -> vector<2x8x32xf32>
    "tpu.trace_stop"() : () -> ()
    %96 = tpu.concatenate %29, %51, %73, %95 in 2 : vector<2x8x32xf32>, vector<2x8x32xf32>, vector<2x8x32xf32>, vector<2x8x32xf32> -> vector<2x8x128xf32>
    %c0_24 = arith.constant 0 : index
    %c0_25 = arith.constant 0 : index
    %c0_26 = arith.constant 0 : index
    %97 = vector.load %arg3[%c0_24, %c0_25, %c0_26] : memref<2x8x128xf32, #tpu.memory_space<vmem>>, vector<2x8x128xf32>
    tpu.vector_store %arg3[%c0_24, %c0_25, %c0_26], %96 {strides = array<i32>} : memref<2x8x128xf32, #tpu.memory_space<vmem>>, vector<2x8x128xf32>,
    return
  }
  func.func @transform_0(%arg0: i32) -> (i32, i32, i32) {
    %c0_i32 = arith.constant 0 : i32
    %c0_i32_0 = arith.constant 0 : i32
    %c0_i32_1 = arith.constant 0 : i32
    %c0_i32_2 = arith.constant 0 : i32
    return %c0_i32, %c0_i32_0, %c0_i32_1 : i32, i32, i32
  }
  func.func @transform_1(%arg0: i32) -> (i32, i32) {
    %c0_i32 = arith.constant 0 : i32
    %c0_i32_0 = arith.constant 0 : i32
    %c0_i32_1 = arith.constant 0 : i32
    return %c0_i32, %c0_i32_0 : i32, i32
  }
  func.func @transform_2(%arg0: i32) -> (i32, i32, i32) {
    %c0_i32 = arith.constant 0 : i32
    %c0_i32_0 = arith.constant 0 : i32
    %c0_i32_1 = arith.constant 0 : i32
    %c0_i32_2 = arith.constant 0 : i32
    return %c0_i32, %c0_i32_0, %c0_i32_1 : i32, i32, i32
  }
}

</mosaic_0001>

<llo_original>
// kernel: tpu_custom_call.1
$region0: #{tpu_custom_call.1}
  #allocation0 [shape = 'u32[]', space=smem, size = 0x4, offset = 0x4, fixed_abs, tag = 'smem constant byte address 0x4 - core index']
  #allocation1 [shape = 'u32[144,128]{1,0:T(1,128)}', space=vmem, size = 0x12000, scoped, tag = 'internal scratch']
  %s0 = inlined_call_operand.hbm [shape: f32[2,8,32], index: 0, kind: input, shape index: {}]
  %s1 = inlined_call_operand.hbm [shape: f32[32,384], index: 1, kind: input, shape index: {}]
  %s2 = inlined_call_operand.hbm [shape: f32[2,8,128], index: 2, kind: output, shape index: {}]
  %s3 = sld [smem:[#allocation0]]
  $region26: #{tpu_custom_call.1} parent=0
    _
  %s5 = ssub.s32 1, %s3
  %s6 = scalar_select 0, %s5, %s3
  $region1: #{tpu_custom_call.1} parent=0
    #allocation2 [shape = 'u8[8192]{0}', space=vmem, size = 0x2000, scoped, tag = 'input window, operand 0, single buffered']
    #allocation3 [shape = 's32[1]{0}', space=sflag, size = 0x4, scoped, tag = 'scoped memory for tpu_custom_call.1']
    #allocation4 [shape = 's32[1]{0}', space=sflag, size = 0x4, scoped, tag = 'scoped memory for tpu_custom_call.1']
    #allocation5 [shape = 'u8[49152]{0}', space=vmem, size = 0xc000, scoped, tag = 'input window, operand 1, single buffered']
    #allocation6 [shape = 's32[1]{0}', space=sflag, size = 0x4, scoped, tag = 'scoped memory for tpu_custom_call.1']
    #allocation7 [shape = 'u8[8192]{0}', space=vmem, size = 0x2000, scoped, tag = 'output window, operand 0, single buffered']
    %7 = vsyncpa [#allocation3], 0
    %8 = vsyncpa [#allocation6], 0
    %9 = vsyncpa [#allocation4], 0
    // Predicated region
    $region2: #{tpu_custom_call.1} parent=1 // pred_check
      _
    $region3: #{tpu_custom_call.1} parent=1 // pred_check_branch
      %11 = sbr.rel (0) target = $region5
    $region4: #{tpu_custom_call.1} parent=1 // pred_region
      %s13 = ssub.s32 256, 256
      %14 = vsyncadd [#allocation3], %s13
      %s15 = sshll.u32 [#allocation2], 4
      %s16 = int_to_ptr.vmem [resolvable:$true] %s15
      %21 = dma.hbm_to_vmem [thread:$0]  %s0, 256, %s16, [#allocation3], 128, 128, 8
    $region5: #{tpu_custom_call.1} parent=1 // pred_fallthru
      _
    // Predicated region
    $region6: #{tpu_custom_call.1} parent=1 // pred_check
      _
    $region7: #{tpu_custom_call.1} parent=1 // pred_check_branch
      %23 = sbr.rel (0) target = $region9
    $region8: #{tpu_custom_call.1} parent=1 // pred_region
      %s25 = ssub.s32 1536, 1536
      %26 = vsyncadd [#allocation6], %s25
      %s27 = sshll.u32 [#allocation5], 4
      %s28 = int_to_ptr.vmem [resolvable:$true] %s27
      %33 = dma.hbm_to_vmem [thread:$0]  %s1, 1536, %s28, [#allocation6], 384, 384, 24
    $region9: #{tpu_custom_call.1} parent=1 // pred_fallthru
      _
    // Predicated region
    $region10: #{tpu_custom_call.1} parent=1 // pred_check
      _
    $region11: #{tpu_custom_call.1} parent=1 // pred_check_branch
      %35 = sbr.rel (0) target = $region13
    $region12: #{tpu_custom_call.1} parent=1 // pred_region
      %36 = dma.done [#allocation3], 256
    $region13: #{tpu_custom_call.1} parent=1 // pred_fallthru
      _
    // Predicated region
    $region14: #{tpu_custom_call.1} parent=1 // pred_check
      _
    $region15: #{tpu_custom_call.1} parent=1 // pred_check_branch
      %38 = sbr.rel (0) target = $region17
    $region16: #{tpu_custom_call.1} parent=1 // pred_region
      %39 = dma.done [#allocation6], 1536
    $region17: #{tpu_custom_call.1} parent=1 // pred_fallthru
      _
    %v40 = vld [vmem:[#allocation2] sm:$0xff]
    %v41 = vld [vmem:[#allocation2 + $0x8] sm:$0xff]
    %v42 = vld [vmem:[#allocation5] sm:$0xff]
    %v43 = vld [vmem:[#allocation5 + $0x8] sm:$0xff]
    %v44 = vld [vmem:[#allocation5 + $0x10] sm:$0xff]
    %v45 = vld [vmem:[#allocation5 + $0x18] sm:$0xff]
    %v46 = vld [vmem:[#allocation5 + $0x20] sm:$0xff]
    %v47 = vld [vmem:[#allocation5 + $0x28] sm:$0xff]
    %v48 = vld [vmem:[#allocation5 + $0x30] sm:$0xff]
    %v49 = vld [vmem:[#allocation5 + $0x38] sm:$0xff]
    %v50 = vld [vmem:[#allocation5 + $0x40] sm:$0xff]
    %v51 = vld [vmem:[#allocation5 + $0x48] sm:$0xff]
    %v52 = vld [vmem:[#allocation5 + $0x50] sm:$0xff]
    %v53 = vld [vmem:[#allocation5 + $0x58] sm:$0xff]
    %vm54 = vcmask 261120
    %v56 = vsel %vm54, %v40, 0
    %v59 = vsel %vm54, %v41, 0
    %61 = vmatprep.subr.mxu0 %v43
    %62 = vmatpush1.msra.mxu0 %v42
    %63 = vmatprep.subr.mxu0 %v46
    %64 = vmatpush1.msra.mxu0 %v45
    %65 = vmatprep.subr.mxu0 %v49
    %66 = vmatpush1.msra.mxu0 %v48
    %67 = vmatprep.subr.mxu0 %v52
    %68 = vmatpush1.msra.mxu0 %v51
    %69 = vmatprep.subr.mxu0 0.0
    %70 = vmatpush1.msra.mxu0 0.0
    %71 = vmatprep.subr.mxu0 0.0
    %72 = vmatpush1.msra.mxu0 0.0
    %73 = vmatprep.subr.mxu0 0.0
    %74 = vmatpush1.msra.mxu0 0.0
    %75 = vmatprep.subr.mxu0 0.0
    %76 = vmatpush1.msra.mxu0 0.0
    %77 = vmatprep.subr.mxu0 0.0
    %78 = vmatpush1.msra.mxu0 0.0
    %79 = vmatprep.subr.mxu0 0.0
    %80 = vmatpush1.msra.mxu0 0.0
    %81 = vmatprep.subr.mxu0 0.0
    %82 = vmatpush1.msra.mxu0 0.0
    %83 = vmatprep.subr.mxu0 0.0
    %84 = vmatpush1.msra.mxu0 0.0
    %85 = vmatprep.subr.mxu0 0.0
    %86 = vmatpush1.msra.mxu0 0.0
    %87 = vmatprep.subr.mxu0 0.0
    %88 = vmatpush1.msra.mxu0 0.0
    %89 = vmatprep.subr.mxu0 0.0
    %90 = vmatpush1.msra.mxu0 0.0
    %91 = vmatprep.subr.mxu0 0.0
    %92 = vmatpush1.msra.mxu0 0.0
    %93 = vmatprep.subr.mxu0 0.0
    %94 = vmatpush1.msra.mxu0 0.0
    %95 = vmatprep.subr.mxu0 0.0
    %96 = vmatpush1.msra.mxu0 0.0
    %97 = vmatprep.subr.mxu0 0.0
    %98 = vmatpush1.msra.mxu0 0.0
    %99 = vmatprep.subr.mxu0 0.0
    %100 = vmatpush1.msra.mxu0 0.0
    %101 = vmatprep.subr.mxu0 0.0
    %102 = vmatpush1.msra.mxu0 0.0
    %103 = vmatprep.subr.mxu0 0.0
    %104 = vmatpush1.msra.mxu0 0.0
    %105 = vmatprep.subr.mxu0 0.0
    %106 = vmatpush1.msra.mxu0 0.0
    %107 = vmatprep.subr.mxu0 0.0
    %108 = vmatpush1.msra.mxu0 0.0
    %109 = vmatprep.subr.mxu0 0.0
    %110 = vmatpush1.msra.mxu0 0.0
    %111 = vmatprep.subr.mxu0 0.0
    %112 = vmatpush1.msra.mxu0 0.0
    %113 = vmatprep.subr.mxu0 0.0
    %114 = vmatpush1.msra.mxu0 0.0
    %115 = vmatprep.subr.mxu0 0.0
    %116 = vmatpush1.msra.mxu0 0.0
    %117 = vmatprep.subr.mxu0 0.0
    %118 = vmatpush1.msra.mxu0 0.0
    %119 = vmatprep.subr.mxu0 0.0
    %120 = vmatpush1.msra.mxu0 0.0
    %121 = vmatprep.subr.mxu0 0.0
    %122 = vmatpush1.msra.mxu0 0.0
    %123 = vmatprep.subr.mxu0 0.0
    %124 = vmatpush1.msra.mxu0 0.0
    %125 = vmatprep.mubr.f32.mxu0 0.0
    %126 = vmatmul.mubr.f32.gmra.mrb[0].mxu0 %v56
    %v127 = vpop.f32.mrb[0].mxu0
    %v128 = vadd.f32 0.0, %v127
    %v129 = vpop.f32.mrb[0].mxu0
    %v130 = vadd.f32 0.0, %v129
    %131 = vmatprep.mubr.f32.mxu0 0.0
    %132 = vmatmul.mubr.f32.gmra.mrb[0].mxu0 %v59
    %v133 = vpop.f32.mrb[0].mxu0
    %v134 = vadd.f32 0.0, %v133
    %v135 = vpop.f32.mrb[0].mxu0
    %v136 = vadd.f32 0.0, %v135
    %137 = vdwg.mxu0
    %138 = vmatprep.subr.mxu0 0.0
    %139 = vmatpush1.msra.mxu0 %v44
    %140 = vmatprep.subr.mxu0 0.0
    %141 = vmatpush1.msra.mxu0 %v47
    %142 = vmatprep.subr.mxu0 0.0
    %143 = vmatpush1.msra.mxu0 %v50
    %144 = vmatprep.subr.mxu0 0.0
    %145 = vmatpush1.msra.mxu0 %v53
    %146 = vmatprep.subr.mxu0 0.0
    %147 = vmatpush1.msra.mxu0 0.0
    %148 = vmatprep.subr.mxu0 0.0
    %149 = vmatpush1.msra.mxu0 0.0
    %150 = vmatprep.subr.mxu0 0.0
    %151 = vmatpush1.msra.mxu0 0.0
    %152 = vmatprep.subr.mxu0 0.0
    %153 = vmatpush1.msra.mxu0 0.0
    %154 = vmatprep.subr.mxu0 0.0
    %155 = vmatpush1.msra.mxu0 0.0
    %156 = vmatprep.subr.mxu0 0.0
    %157 = vmatpush1.msra.mxu0 0.0
    %158 = vmatprep.subr.mxu0 0.0
    %159 = vmatpush1.msra.mxu0 0.0
    %160 = vmatprep.subr.mxu0 0.0
    %161 = vmatpush1.msra.mxu0 0.0
    %162 = vmatprep.subr.mxu0 0.0
    %163 = vmatpush1.msra.mxu0 0.0
    %164 = vmatprep.subr.mxu0 0.0
    %165 = vmatpush1.msra.mxu0 0.0
    %166 = vmatprep.subr.mxu0 0.0
    %167 = vmatpush1.msra.mxu0 0.0
    %168 = vmatprep.subr.mxu0 0.0
    %169 = vmatpush1.msra.mxu0 0.0
    %170 = vmatprep.subr.mxu0 0.0
    %171 = vmatpush1.msra.mxu0 0.0
    %172 = vmatprep.subr.mxu0 0.0
    %173 = vmatpush1.msra.mxu0 0.0
    %174 = vmatprep.subr.mxu0 0.0
    %175 = vmatpush1.msra.mxu0 0.0
    %176 = vmatprep.subr.mxu0 0.0
    %177 = vmatpush1.msra.mxu0 0.0
    %178 = vmatprep.subr.mxu0 0.0
    %179 = vmatpush1.msra.mxu0 0.0
    %180 = vmatprep.subr.mxu0 0.0
    %181 = vmatpush1.msra.mxu0 0.0
    %182 = vmatprep.subr.mxu0 0.0
    %183 = vmatpush1.msra.mxu0 0.0
    %184 = vmatprep.subr.mxu0 0.0
    %185 = vmatpush1.msra.mxu0 0.0
    %186 = vmatprep.subr.mxu0 0.0
    %187 = vmatpush1.msra.mxu0 0.0
    %188 = vmatprep.subr.mxu0 0.0
    %189 = vmatpush1.msra.mxu0 0.0
    %190 = vmatprep.subr.mxu0 0.0
    %191 = vmatpush1.msra.mxu0 0.0
    %192 = vmatprep.subr.mxu0 0.0
    %193 = vmatpush1.msra.mxu0 0.0
    %194 = vmatprep.subr.mxu0 0.0
    %195 = vmatpush1.msra.mxu0 0.0
    %196 = vmatprep.subr.mxu0 0.0
    %197 = vmatpush1.msra.mxu0 0.0
    %198 = vmatprep.subr.mxu0 0.0
    %199 = vmatpush1.msra.mxu0 0.0
    %200 = vmatprep.subr.mxu0 0.0
    %201 = vmatpush1.msra.mxu0 0.0
    %202 = vmatprep.mubr.f32.mxu0 0.0
    %203 = vmatmul.mubr.f32.gmra.mrb[0].mxu0 %v56
    %v204 = vpop.f32.mrb[0].mxu0
    %v205 = vadd.f32 0.0, %v204
    %v206 = vpop.f32.mrb[0].mxu0
    %207 = vmatprep.mubr.f32.mxu0 0.0
    %208 = vmatmul.mubr.f32.gmra.mrb[0].mxu0 %v59
    %v209 = vpop.f32.mrb[0].mxu0
    %v210 = vadd.f32 0.0, %v209
    %v211 = vpop.f32.mrb[0].mxu0
    %212 = vdwg.mxu0
    %v213 = vlaneseq
    %v214 = vshrl.u32 %v213, 7
    %v215 = vlaneseq
    %v216 = vand.u32 %v215, 127
    %vm217 = vcmp.gt.s32.totalorder %v216, %v214
    %v219 = vsel %vm54, %v128, 0
    %v222 = vsel %vm54, %v130, 0
    %224 = vmatprep.subr.mxu0 0.0
    %225 = vmatpush1.xpose.msra.mxu0 %v222
    %226 = vmatprep.subr.mxu0 0.0
    %227 = vmatpush1.xpose.msra.mxu0 0.0
    %228 = vmatprep.subr.mxu0 0.0
    %229 = vmatpush1.xpose.msra.mxu0 0.0
    %230 = vmatprep.subr.mxu0 0.0
    %231 = vmatpush1.xpose.msra.mxu0 0.0
    %232 = vmatprep.subr.mxu0 0.0
    %233 = vmatpush1.xpose.msra.mxu0 0.0
    %234 = vmatprep.subr.mxu0 0.0
    %235 = vmatpush1.xpose.msra.mxu0 0.0
    %236 = vmatprep.subr.mxu0 0.0
    %237 = vmatpush1.xpose.msra.mxu0 0.0
    %238 = vmatprep.subr.mxu0 0.0
    %239 = vmatpush1.xpose.msra.mxu0 0.0
    %240 = vmatprep.subr.mxu0 0.0
    %241 = vmatpush1.xpose.msra.mxu0 0.0
    %242 = vmatprep.subr.mxu0 0.0
    %243 = vmatpush1.xpose.msra.mxu0 0.0
    %244 = vmatprep.subr.mxu0 0.0
    %245 = vmatpush1.xpose.msra.mxu0 0.0
    %246 = vmatprep.subr.mxu0 0.0
    %247 = vmatpush1.xpose.msra.mxu0 0.0
    %248 = vmatprep.subr.mxu0 0.0
    %249 = vmatpush1.xpose.msra.mxu0 0.0
    %250 = vmatprep.subr.mxu0 0.0
    %251 = vmatpush1.xpose.msra.mxu0 0.0
    %252 = vmatprep.subr.mxu0 0.0
    %253 = vmatpush1.xpose.msra.mxu0 0.0
    %254 = vmatprep.subr.mxu0 0.0
    %255 = vmatpush1.xpose.msra.mxu0 0.0
    %256 = vmatprep.subr.mxu0 0.0
    %257 = vmatpush1.xpose.msra.mxu0 0.0
    %258 = vmatprep.subr.mxu0 0.0
    %259 = vmatpush1.xpose.msra.mxu0 0.0
    %260 = vmatprep.subr.mxu0 0.0
    %261 = vmatpush1.xpose.msra.mxu0 0.0
    %262 = vmatprep.subr.mxu0 0.0
    %263 = vmatpush1.xpose.msra.mxu0 0.0
    %264 = vmatprep.subr.mxu0 0.0
    %265 = vmatpush1.xpose.msra.mxu0 0.0
    %266 = vmatprep.subr.mxu0 0.0
    %267 = vmatpush1.xpose.msra.mxu0 0.0
    %268 = vmatprep.subr.mxu0 0.0
    %269 = vmatpush1.xpose.msra.mxu0 0.0
    %270 = vmatprep.subr.mxu0 0.0
    %271 = vmatpush1.xpose.msra.mxu0 0.0
    %272 = vmatprep.subr.mxu0 0.0
    %273 = vmatpush1.xpose.msra.mxu0 0.0
    %274 = vmatprep.subr.mxu0 0.0
    %275 = vmatpush1.xpose.msra.mxu0 0.0
    %276 = vmatprep.subr.mxu0 0.0
    %277 = vmatpush1.xpose.msra.mxu0 0.0
    %278 = vmatprep.subr.mxu0 0.0
    %279 = vmatpush1.xpose.msra.mxu0 0.0
    %280 = vmatprep.subr.mxu0 0.0
    %281 = vmatpush1.xpose.msra.mxu0 0.0
    %282 = vmatprep.subr.mxu0 0.0
    %283 = vmatpush1.xpose.msra.mxu0 0.0
    %284 = vmatprep.subr.mxu0 0.0
    %285 = vmatpush1.xpose.msra.mxu0 0.0
    %286 = vmatprep.subr.mxu0 0.0
    %287 = vmatpush1.xpose.msra.mxu0 0.0
    %288 = vmatprep.mubr.f32.mxu0 0.0
    %289 = vmatmul.mubr.f32.gmra.mrb[0].mxu0 %v219
    %v290 = vpop.f32.mrb[0].mxu0
    %v291 = vadd.f32 0.0, %v290
    %v292 = vpop.f32.mrb[0].mxu0
    %293 = vdwg.mxu0
    %v295 = vsel %vm54, %v134, 0
    %v298 = vsel %vm54, %v136, 0
    %300 = vmatprep.subr.mxu0 0.0
    %301 = vmatpush1.xpose.msra.mxu0 %v298
    %302 = vmatprep.subr.mxu0 0.0
    %303 = vmatpush1.xpose.msra.mxu0 0.0
    %304 = vmatprep.subr.mxu0 0.0
    %305 = vmatpush1.xpose.msra.mxu0 0.0
    %306 = vmatprep.subr.mxu0 0.0
    %307 = vmatpush1.xpose.msra.mxu0 0.0
    %308 = vmatprep.subr.mxu0 0.0
    %309 = vmatpush1.xpose.msra.mxu0 0.0
    %310 = vmatprep.subr.mxu0 0.0
    %311 = vmatpush1.xpose.msra.mxu0 0.0
    %312 = vmatprep.subr.mxu0 0.0
    %313 = vmatpush1.xpose.msra.mxu0 0.0
    %314 = vmatprep.subr.mxu0 0.0
    %315 = vmatpush1.xpose.msra.mxu0 0.0
    %316 = vmatprep.subr.mxu0 0.0
    %317 = vmatpush1.xpose.msra.mxu0 0.0
    %318 = vmatprep.subr.mxu0 0.0
    %319 = vmatpush1.xpose.msra.mxu0 0.0
    %320 = vmatprep.subr.mxu0 0.0
    %321 = vmatpush1.xpose.msra.mxu0 0.0
    %322 = vmatprep.subr.mxu0 0.0
    %323 = vmatpush1.xpose.msra.mxu0 0.0
    %324 = vmatprep.subr.mxu0 0.0
    %325 = vmatpush1.xpose.msra.mxu0 0.0
    %326 = vmatprep.subr.mxu0 0.0
    %327 = vmatpush1.xpose.msra.mxu0 0.0
    %328 = vmatprep.subr.mxu0 0.0
    %329 = vmatpush1.xpose.msra.mxu0 0.0
    %330 = vmatprep.subr.mxu0 0.0
    %331 = vmatpush1.xpose.msra.mxu0 0.0
    %332 = vmatprep.subr.mxu0 0.0
    %333 = vmatpush1.xpose.msra.mxu0 0.0
    %334 = vmatprep.subr.mxu0 0.0
    %335 = vmatpush1.xpose.msra.mxu0 0.0
    %336 = vmatprep.subr.mxu0 0.0
    %337 = vmatpush1.xpose.msra.mxu0 0.0
    %338 = vmatprep.subr.mxu0 0.0
    %339 = vmatpush1.xpose.msra.mxu0 0.0
    %340 = vmatprep.subr.mxu0 0.0
    %341 = vmatpush1.xpose.msra.mxu0 0.0
    %342 = vmatprep.subr.mxu0 0.0
    %343 = vmatpush1.xpose.msra.mxu0 0.0
    %344 = vmatprep.subr.mxu0 0.0
    %345 = vmatpush1.xpose.msra.mxu0 0.0
    %346 = vmatprep.subr.mxu0 0.0
    %347 = vmatpush1.xpose.msra.mxu0 0.0
    %348 = vmatprep.subr.mxu0 0.0
    %349 = vmatpush1.xpose.msra.mxu0 0.0
    %350 = vmatprep.subr.mxu0 0.0
    %351 = vmatpush1.xpose.msra.mxu0 0.0
    %352 = vmatprep.subr.mxu0 0.0
    %353 = vmatpush1.xpose.msra.mxu0 0.0
    %354 = vmatprep.subr.mxu0 0.0
    %355 = vmatpush1.xpose.msra.mxu0 0.0
    %356 = vmatprep.subr.mxu0 0.0
    %357 = vmatpush1.xpose.msra.mxu0 0.0
    %358 = vmatprep.subr.mxu0 0.0
    %359 = vmatpush1.xpose.msra.mxu0 0.0
    %360 = vmatprep.subr.mxu0 0.0
    %361 = vmatpush1.xpose.msra.mxu0 0.0
    %362 = vmatprep.subr.mxu0 0.0
    %363 = vmatpush1.xpose.msra.mxu0 0.0
    %364 = vmatprep.mubr.f32.mxu0 0.0
    %365 = vmatmul.mubr.f32.gmra.mrb[0].mxu0 %v295
    %v366 = vpop.f32.mrb[0].mxu0
    %v367 = vadd.f32 0.0, %v366
    %v368 = vpop.f32.mrb[0].mxu0
    %369 = vdwg.mxu0
    %v370 = vsel %vm217, 1, 0
    %vm371 = vcmp.eq.s32.totalorder %v370, 1
    %v372 = vsel %vm371, -1e+30, %v291
    %v373 = vsel %vm371, -1e+30, %v367
    %vm374 = vcmask 64512
    %v375 = vsel %vm374, %v372, -inf
    %376 = vmax.xlane.f32.xlu0 %v375
    %v377 = vpop.xlane.xlu0 %376
    %v378 = vsel %vm374, %v373, -inf
    %379 = vmax.xlane.f32.xlu0 %v378
    %v380 = vpop.xlane.xlu0 %379
    %v381 = vsub.f32 %v372, %v377
    %v382 = vsub.f32 %v373, %v380
    %v383 = vmul.f32 %v381, 1.442695
    %v384 = vpow.pop %v383
    %v385 = vmul.f32 %v382, 1.442695
    %v386 = vpow.pop %v385
    %v387 = vsel %vm374, %v384, 0.0
    %388 = vadd.xlane.f32.xlu0 %v387
    %v389 = vpop.xlane.xlu0 %388
    %v390 = vsel %vm374, %v386, 0.0
    %391 = vadd.xlane.f32.xlu0 %v390
    %v392 = vpop.xlane.xlu0 %391
    %v393 = vrcp.pop %v389
    %v394 = vrcp.pop %v392
    %v395 = vmul.f32 %v384, %v393
    %v396 = vmul.f32 %v386, %v394
    %v398 = vsel %vm374, %v395, 0
    %400 = vmatprep.subr.mxu0 0.0
    %401 = vmatpush1.msra.mxu0 %v205
    %402 = vmatprep.subr.mxu0 0.0
    %403 = vmatpush1.msra.mxu0 0.0
    %404 = vmatprep.subr.mxu0 0.0
    %405 = vmatpush1.msra.mxu0 0.0
    %406 = vmatprep.subr.mxu0 0.0
    %407 = vmatpush1.msra.mxu0 0.0
    %408 = vmatprep.subr.mxu0 0.0
    %409 = vmatpush1.msra.mxu0 0.0
    %410 = vmatprep.subr.mxu0 0.0
    %411 = vmatpush1.msra.mxu0 0.0
    %412 = vmatprep.subr.mxu0 0.0
    %413 = vmatpush1.msra.mxu0 0.0
    %414 = vmatprep.subr.mxu0 0.0
    %415 = vmatpush1.msra.mxu0 0.0
    %416 = vmatprep.subr.mxu0 0.0
    %417 = vmatpush1.msra.mxu0 0.0
    %418 = vmatprep.subr.mxu0 0.0
    %419 = vmatpush1.msra.mxu0 0.0
    %420 = vmatprep.subr.mxu0 0.0
    %421 = vmatpush1.msra.mxu0 0.0
    %422 = vmatprep.subr.mxu0 0.0
    %423 = vmatpush1.msra.mxu0 0.0
    %424 = vmatprep.subr.mxu0 0.0
    %425 = vmatpush1.msra.mxu0 0.0
    %426 = vmatprep.subr.mxu0 0.0
    %427 = vmatpush1.msra.mxu0 0.0
    %428 = vmatprep.subr.mxu0 0.0
    %429 = vmatpush1.msra.mxu0 0.0
    %430 = vmatprep.subr.mxu0 0.0
    %431 = vmatpush1.msra.mxu0 0.0
    %432 = vmatprep.subr.mxu0 0.0
    %433 = vmatpush1.msra.mxu0 0.0
    %434 = vmatprep.subr.mxu0 0.0
    %435 = vmatpush1.msra.mxu0 0.0
    %436 = vmatprep.subr.mxu0 0.0
    %437 = vmatpush1.msra.mxu0 0.0
    %438 = vmatprep.subr.mxu0 0.0
    %439 = vmatpush1.msra.mxu0 0.0
    %440 = vmatprep.subr.mxu0 0.0
    %441 = vmatpush1.msra.mxu0 0.0
    %442 = vmatprep.subr.mxu0 0.0
    %443 = vmatpush1.msra.mxu0 0.0
    %444 = vmatprep.subr.mxu0 0.0
    %445 = vmatpush1.msra.mxu0 0.0
    %446 = vmatprep.subr.mxu0 0.0
    %447 = vmatpush1.msra.mxu0 0.0
    %448 = vmatprep.subr.mxu0 0.0
    %449 = vmatpush1.msra.mxu0 0.0
    %450 = vmatprep.subr.mxu0 0.0
    %451 = vmatpush1.msra.mxu0 0.0
    %452 = vmatprep.subr.mxu0 0.0
    %453 = vmatpush1.msra.mxu0 0.0
    %454 = vmatprep.subr.mxu0 0.0
    %455 = vmatpush1.msra.mxu0 0.0
    %456 = vmatprep.subr.mxu0 0.0
    %457 = vmatpush1.msra.mxu0 0.0
    %458 = vmatprep.subr.mxu0 0.0
    %459 = vmatpush1.msra.mxu0 0.0
    %460 = vmatprep.subr.mxu0 0.0
    %461 = vmatpush1.msra.mxu0 0.0
    %462 = vmatprep.subr.mxu0 0.0
    %463 = vmatpush1.msra.mxu0 0.0
    %464 = vmatprep.mubr.f32.mxu0 0.0
    %465 = vmatmul.mubr.f32.gmra.mrb[0].mxu0 %v398
    %v466 = vpop.f32.mrb[0].mxu0
    %v467 = vadd.f32 0.0, %v466
    %v468 = vpop.f32.mrb[0].mxu0
    %469 = vdwg.mxu0
    %v471 = vsel %vm374, %v396, 0
    %473 = vmatprep.subr.mxu0 0.0
    %474 = vmatpush1.msra.mxu0 %v210
    %475 = vmatprep.subr.mxu0 0.0
    %476 = vmatpush1.msra.mxu0 0.0
    %477 = vmatprep.subr.mxu0 0.0
    %478 = vmatpush1.msra.mxu0 0.0
    %479 = vmatprep.subr.mxu0 0.0
    %480 = vmatpush1.msra.mxu0 0.0
    %481 = vmatprep.subr.mxu0 0.0
    %482 = vmatpush1.msra.mxu0 0.0
    %483 = vmatprep.subr.mxu0 0.0
    %484 = vmatpush1.msra.mxu0 0.0
    %485 = vmatprep.subr.mxu0 0.0
    %486 = vmatpush1.msra.mxu0 0.0
    %487 = vmatprep.subr.mxu0 0.0
    %488 = vmatpush1.msra.mxu0 0.0
    %489 = vmatprep.subr.mxu0 0.0
    %490 = vmatpush1.msra.mxu0 0.0
    %491 = vmatprep.subr.mxu0 0.0
    %492 = vmatpush1.msra.mxu0 0.0
    %493 = vmatprep.subr.mxu0 0.0
    %494 = vmatpush1.msra.mxu0 0.0
    %495 = vmatprep.subr.mxu0 0.0
    %496 = vmatpush1.msra.mxu0 0.0
    %497 = vmatprep.subr.mxu0 0.0
    %498 = vmatpush1.msra.mxu0 0.0
    %499 = vmatprep.subr.mxu0 0.0
    %500 = vmatpush1.msra.mxu0 0.0
    %501 = vmatprep.subr.mxu0 0.0
    %502 = vmatpush1.msra.mxu0 0.0
    %503 = vmatprep.subr.mxu0 0.0
    %504 = vmatpush1.msra.mxu0 0.0
    %505 = vmatprep.subr.mxu0 0.0
    %506 = vmatpush1.msra.mxu0 0.0
    %507 = vmatprep.subr.mxu0 0.0
    %508 = vmatpush1.msra.mxu0 0.0
    %509 = vmatprep.subr.mxu0 0.0
    %510 = vmatpush1.msra.mxu0 0.0
    %511 = vmatprep.subr.mxu0 0.0
    %512 = vmatpush1.msra.mxu0 0.0
    %513 = vmatprep.subr.mxu0 0.0
    %514 = vmatpush1.msra.mxu0 0.0
    %515 = vmatprep.subr.mxu0 0.0
    %516 = vmatpush1.msra.mxu0 0.0
    %517 = vmatprep.subr.mxu0 0.0
    %518 = vmatpush1.msra.mxu0 0.0
    %519 = vmatprep.subr.mxu0 0.0
    %520 = vmatpush1.msra.mxu0 0.0
    %521 = vmatprep.subr.mxu0 0.0
    %522 = vmatpush1.msra.mxu0 0.0
    %523 = vmatprep.subr.mxu0 0.0
    %524 = vmatpush1.msra.mxu0 0.0
    %525 = vmatprep.subr.mxu0 0.0
    %526 = vmatpush1.msra.mxu0 0.0
    %527 = vmatprep.subr.mxu0 0.0
    %528 = vmatpush1.msra.mxu0 0.0
    %529 = vmatprep.subr.mxu0 0.0
    %530 = vmatpush1.msra.mxu0 0.0
    %531 = vmatprep.subr.mxu0 0.0
    %532 = vmatpush1.msra.mxu0 0.0
    %533 = vmatprep.subr.mxu0 0.0
    %534 = vmatpush1.msra.mxu0 0.0
    %535 = vmatprep.subr.mxu0 0.0
    %536 = vmatpush1.msra.mxu0 0.0
    %537 = vmatprep.mubr.f32.mxu0 0.0
    %538 = vmatmul.mubr.f32.gmra.mrb[0].mxu0 %v471
    %v539 = vpop.f32.mrb[0].mxu0
    %v540 = vadd.f32 0.0, %v539
    %v541 = vpop.f32.mrb[0].mxu0
    %542 = vdwg.mxu0
    %543 = vrot.lane.b32.xlu0 %v128, 96
    %v544 = vpop.permute.xlu0 %543
    %545 = vrot.lane.b32.xlu0 %v130, 96
    %v546 = vpop.permute.xlu0 %545
    %v547 = vsel %vm54, %v544, 0
    %v549 = vsel %vm54, %v546, 0
    %551 = vmatprep.subr.mxu0 0.0
    %552 = vmatpush1.xpose.msra.mxu0 %v549
    %553 = vmatprep.subr.mxu0 0.0
    %554 = vmatpush1.xpose.msra.mxu0 0.0
    %555 = vmatprep.subr.mxu0 0.0
    %556 = vmatpush1.xpose.msra.mxu0 0.0
    %557 = vmatprep.subr.mxu0 0.0
    %558 = vmatpush1.xpose.msra.mxu0 0.0
    %559 = vmatprep.subr.mxu0 0.0
    %560 = vmatpush1.xpose.msra.mxu0 0.0
    %561 = vmatprep.subr.mxu0 0.0
    %562 = vmatpush1.xpose.msra.mxu0 0.0
    %563 = vmatprep.subr.mxu0 0.0
    %564 = vmatpush1.xpose.msra.mxu0 0.0
    %565 = vmatprep.subr.mxu0 0.0
    %566 = vmatpush1.xpose.msra.mxu0 0.0
    %567 = vmatprep.subr.mxu0 0.0
    %568 = vmatpush1.xpose.msra.mxu0 0.0
    %569 = vmatprep.subr.mxu0 0.0
    %570 = vmatpush1.xpose.msra.mxu0 0.0
    %571 = vmatprep.subr.mxu0 0.0
    %572 = vmatpush1.xpose.msra.mxu0 0.0
    %573 = vmatprep.subr.mxu0 0.0
    %574 = vmatpush1.xpose.msra.mxu0 0.0
    %575 = vmatprep.subr.mxu0 0.0
    %576 = vmatpush1.xpose.msra.mxu0 0.0
    %577 = vmatprep.subr.mxu0 0.0
    %578 = vmatpush1.xpose.msra.mxu0 0.0
    %579 = vmatprep.subr.mxu0 0.0
    %580 = vmatpush1.xpose.msra.mxu0 0.0
    %581 = vmatprep.subr.mxu0 0.0
    %582 = vmatpush1.xpose.msra.mxu0 0.0
    %583 = vmatprep.subr.mxu0 0.0
    %584 = vmatpush1.xpose.msra.mxu0 0.0
    %585 = vmatprep.subr.mxu0 0.0
    %586 = vmatpush1.xpose.msra.mxu0 0.0
    %587 = vmatprep.subr.mxu0 0.0
    %588 = vmatpush1.xpose.msra.mxu0 0.0
    %589 = vmatprep.subr.mxu0 0.0
    %590 = vmatpush1.xpose.msra.mxu0 0.0
    %591 = vmatprep.subr.mxu0 0.0
    %592 = vmatpush1.xpose.msra.mxu0 0.0
    %593 = vmatprep.subr.mxu0 0.0
    %594 = vmatpush1.xpose.msra.mxu0 0.0
    %595 = vmatprep.subr.mxu0 0.0
    %596 = vmatpush1.xpose.msra.mxu0 0.0
    %597 = vmatprep.subr.mxu0 0.0
    %598 = vmatpush1.xpose.msra.mxu0 0.0
    %599 = vmatprep.subr.mxu0 0.0
    %600 = vmatpush1.xpose.msra.mxu0 0.0
    %601 = vmatprep.subr.mxu0 0.0
    %602 = vmatpush1.xpose.msra.mxu0 0.0
    %603 = vmatprep.subr.mxu0 0.0
    %604 = vmatpush1.xpose.msra.mxu0 0.0
    %605 = vmatprep.subr.mxu0 0.0
    %606 = vmatpush1.xpose.msra.mxu0 0.0
    %607 = vmatprep.subr.mxu0 0.0
    %608 = vmatpush1.xpose.msra.mxu0 0.0
    %609 = vmatprep.subr.mxu0 0.0
    %610 = vmatpush1.xpose.msra.mxu0 0.0
    %611 = vmatprep.subr.mxu0 0.0
    %612 = vmatpush1.xpose.msra.mxu0 0.0
    %613 = vmatprep.subr.mxu0 0.0
    %614 = vmatpush1.xpose.msra.mxu0 0.0
    %615 = vmatprep.mubr.f32.mxu0 0.0
    %616 = vmatmul.mubr.f32.gmra.mrb[0].mxu0 %v547
    %v617 = vpop.f32.mrb[0].mxu0
    %v618 = vadd.f32 0.0, %v617
    %v619 = vpop.f32.mrb[0].mxu0
    %620 = vdwg.mxu0
    %621 = vrot.lane.b32.xlu0 %v134, 96
    %v622 = vpop.permute.xlu0 %621
    %623 = vrot.lane.b32.xlu0 %v136, 96
    %v624 = vpop.permute.xlu0 %623
    %v625 = vsel %vm54, %v622, 0
    %v627 = vsel %vm54, %v624, 0
    %629 = vmatprep.subr.mxu0 0.0
    %630 = vmatpush1.xpose.msra.mxu0 %v627
    %631 = vmatprep.subr.mxu0 0.0
    %632 = vmatpush1.xpose.msra.mxu0 0.0
    %633 = vmatprep.subr.mxu0 0.0
    %634 = vmatpush1.xpose.msra.mxu0 0.0
    %635 = vmatprep.subr.mxu0 0.0
    %636 = vmatpush1.xpose.msra.mxu0 0.0
    %637 = vmatprep.subr.mxu0 0.0
    %638 = vmatpush1.xpose.msra.mxu0 0.0
    %639 = vmatprep.subr.mxu0 0.0
    %640 = vmatpush1.xpose.msra.mxu0 0.0
    %641 = vmatprep.subr.mxu0 0.0
    %642 = vmatpush1.xpose.msra.mxu0 0.0
    %643 = vmatprep.subr.mxu0 0.0
    %644 = vmatpush1.xpose.msra.mxu0 0.0
    %645 = vmatprep.subr.mxu0 0.0
    %646 = vmatpush1.xpose.msra.mxu0 0.0
    %647 = vmatprep.subr.mxu0 0.0
    %648 = vmatpush1.xpose.msra.mxu0 0.0
    %649 = vmatprep.subr.mxu0 0.0
    %650 = vmatpush1.xpose.msra.mxu0 0.0
    %651 = vmatprep.subr.mxu0 0.0
    %652 = vmatpush1.xpose.msra.mxu0 0.0
    %653 = vmatprep.subr.mxu0 0.0
    %654 = vmatpush1.xpose.msra.mxu0 0.0
    %655 = vmatprep.subr.mxu0 0.0
    %656 = vmatpush1.xpose.msra.mxu0 0.0
    %657 = vmatprep.subr.mxu0 0.0
    %658 = vmatpush1.xpose.msra.mxu0 0.0
    %659 = vmatprep.subr.mxu0 0.0
    %660 = vmatpush1.xpose.msra.mxu0 0.0
    %661 = vmatprep.subr.mxu0 0.0
    %662 = vmatpush1.xpose.msra.mxu0 0.0
    %663 = vmatprep.subr.mxu0 0.0
    %664 = vmatpush1.xpose.msra.mxu0 0.0
    %665 = vmatprep.subr.mxu0 0.0
    %666 = vmatpush1.xpose.msra.mxu0 0.0
    %667 = vmatprep.subr.mxu0 0.0
    %668 = vmatpush1.xpose.msra.mxu0 0.0
    %669 = vmatprep.subr.mxu0 0.0
    %670 = vmatpush1.xpose.msra.mxu0 0.0
    %671 = vmatprep.subr.mxu0 0.0
    %672 = vmatpush1.xpose.msra.mxu0 0.0
    %673 = vmatprep.subr.mxu0 0.0
    %674 = vmatpush1.xpose.msra.mxu0 0.0
    %675 = vmatprep.subr.mxu0 0.0
    %676 = vmatpush1.xpose.msra.mxu0 0.0
    %677 = vmatprep.subr.mxu0 0.0
    %678 = vmatpush1.xpose.msra.mxu0 0.0
    %679 = vmatprep.subr.mxu0 0.0
    %680 = vmatpush1.xpose.msra.mxu0 0.0
    %681 = vmatprep.subr.mxu0 0.0
    %682 = vmatpush1.xpose.msra.mxu0 0.0
    %683 = vmatprep.subr.mxu0 0.0
    %684 = vmatpush1.xpose.msra.mxu0 0.0
    %685 = vmatprep.subr.mxu0 0.0
    %686 = vmatpush1.xpose.msra.mxu0 0.0
    %687 = vmatprep.subr.mxu0 0.0
    %688 = vmatpush1.xpose.msra.mxu0 0.0
    %689 = vmatprep.subr.mxu0 0.0
    %690 = vmatpush1.xpose.msra.mxu0 0.0
    %691 = vmatprep.subr.mxu0 0.0
    %692 = vmatpush1.xpose.msra.mxu0 0.0
    %693 = vmatprep.mubr.f32.mxu0 0.0
    %694 = vmatmul.mubr.f32.gmra.mrb[0].mxu0 %v625
    %v695 = vpop.f32.mrb[0].mxu0
    %v696 = vadd.f32 0.0, %v695
    %v697 = vpop.f32.mrb[0].mxu0
    %698 = vdwg.mxu0
    %v699 = vsel %vm371, -1e+30, %v618
    %v700 = vsel %vm371, -1e+30, %v696
    %v701 = vsel %vm374, %v699, -inf
    %702 = vmax.xlane.f32.xlu0 %v701
    %v703 = vpop.xlane.xlu0 %702
    %v704 = vsel %vm374, %v700, -inf
    %705 = vmax.xlane.f32.xlu0 %v704
    %v706 = vpop.xlane.xlu0 %705
    %v707 = vsub.f32 %v699, %v703
    %v708 = vsub.f32 %v700, %v706
    %v709 = vmul.f32 %v707, 1.442695
    %v710 = vpow.pop %v709
    %v711 = vmul.f32 %v708, 1.442695
    %v712 = vpow.pop %v711
    %v713 = vsel %vm374, %v710, 0.0
    %714 = vadd.xlane.f32.xlu0 %v713
    %v715 = vpop.xlane.xlu0 %714
    %v716 = vsel %vm374, %v712, 0.0
    %717 = vadd.xlane.f32.xlu0 %v716
    %v718 = vpop.xlane.xlu0 %717
    %v719 = vrcp.pop %v715
    %v720 = vrcp.pop %v718
    %v721 = vmul.f32 %v710, %v719
    %v722 = vmul.f32 %v712, %v720
    %724 = vrot.lane.b32.xlu0 %v205, 96
    %v725 = vpop.permute.xlu0 %724
    %v728 = vsel %vm374, %v721, 0
    %730 = vmatprep.subr.mxu0 0.0
    %731 = vmatpush1.msra.mxu0 %v725
    %732 = vmatprep.subr.mxu0 0.0
    %733 = vmatpush1.msra.mxu0 0.0
    %734 = vmatprep.subr.mxu0 0.0
    %735 = vmatpush1.msra.mxu0 0.0
    %736 = vmatprep.subr.mxu0 0.0
    %737 = vmatpush1.msra.mxu0 0.0
    %738 = vmatprep.subr.mxu0 0.0
    %739 = vmatpush1.msra.mxu0 0.0
    %740 = vmatprep.subr.mxu0 0.0
    %741 = vmatpush1.msra.mxu0 0.0
    %742 = vmatprep.subr.mxu0 0.0
    %743 = vmatpush1.msra.mxu0 0.0
    %744 = vmatprep.subr.mxu0 0.0
    %745 = vmatpush1.msra.mxu0 0.0
    %746 = vmatprep.subr.mxu0 0.0
    %747 = vmatpush1.msra.mxu0 0.0
    %748 = vmatprep.subr.mxu0 0.0
    %749 = vmatpush1.msra.mxu0 0.0
    %750 = vmatprep.subr.mxu0 0.0
    %751 = vmatpush1.msra.mxu0 0.0
    %752 = vmatprep.subr.mxu0 0.0
    %753 = vmatpush1.msra.mxu0 0.0
    %754 = vmatprep.subr.mxu0 0.0
    %755 = vmatpush1.msra.mxu0 0.0
    %756 = vmatprep.subr.mxu0 0.0
    %757 = vmatpush1.msra.mxu0 0.0
    %758 = vmatprep.subr.mxu0 0.0
    %759 = vmatpush1.msra.mxu0 0.0
    %760 = vmatprep.subr.mxu0 0.0
    %761 = vmatpush1.msra.mxu0 0.0
    %762 = vmatprep.subr.mxu0 0.0
    %763 = vmatpush1.msra.mxu0 0.0
    %764 = vmatprep.subr.mxu0 0.0
    %765 = vmatpush1.msra.mxu0 0.0
    %766 = vmatprep.subr.mxu0 0.0
    %767 = vmatpush1.msra.mxu0 0.0
    %768 = vmatprep.subr.mxu0 0.0
    %769 = vmatpush1.msra.mxu0 0.0
    %770 = vmatprep.subr.mxu0 0.0
    %771 = vmatpush1.msra.mxu0 0.0
    %772 = vmatprep.subr.mxu0 0.0
    %773 = vmatpush1.msra.mxu0 0.0
    %774 = vmatprep.subr.mxu0 0.0
    %775 = vmatpush1.msra.mxu0 0.0
    %776 = vmatprep.subr.mxu0 0.0
    %777 = vmatpush1.msra.mxu0 0.0
    %778 = vmatprep.subr.mxu0 0.0
    %779 = vmatpush1.msra.mxu0 0.0
    %780 = vmatprep.subr.mxu0 0.0
    %781 = vmatpush1.msra.mxu0 0.0
    %782 = vmatprep.subr.mxu0 0.0
    %783 = vmatpush1.msra.mxu0 0.0
    %784 = vmatprep.subr.mxu0 0.0
    %785 = vmatpush1.msra.mxu0 0.0
    %786 = vmatprep.subr.mxu0 0.0
    %787 = vmatpush1.msra.mxu0 0.0
    %788 = vmatprep.subr.mxu0 0.0
    %789 = vmatpush1.msra.mxu0 0.0
    %790 = vmatprep.subr.mxu0 0.0
    %791 = vmatpush1.msra.mxu0 0.0
    %792 = vmatprep.subr.mxu0 0.0
    %793 = vmatpush1.msra.mxu0 0.0
    %794 = vmatprep.mubr.f32.mxu0 0.0
    %795 = vmatmul.mubr.f32.gmra.mrb[0].mxu0 %v728
    %v796 = vpop.f32.mrb[0].mxu0
    %v797 = vadd.f32 0.0, %v796
    %v798 = vpop.f32.mrb[0].mxu0
    %799 = vdwg.mxu0
    %801 = vrot.lane.b32.xlu0 %v210, 96
    %v802 = vpop.permute.xlu0 %801
    %v805 = vsel %vm374, %v722, 0
    %807 = vmatprep.subr.mxu0 0.0
    %808 = vmatpush1.msra.mxu0 %v802
    %809 = vmatprep.subr.mxu0 0.0
    %810 = vmatpush1.msra.mxu0 0.0
    %811 = vmatprep.subr.mxu0 0.0
    %812 = vmatpush1.msra.mxu0 0.0
    %813 = vmatprep.subr.mxu0 0.0
    %814 = vmatpush1.msra.mxu0 0.0
    %815 = vmatprep.subr.mxu0 0.0
    %816 = vmatpush1.msra.mxu0 0.0
    %817 = vmatprep.subr.mxu0 0.0
    %818 = vmatpush1.msra.mxu0 0.0
    %819 = vmatprep.subr.mxu0 0.0
    %820 = vmatpush1.msra.mxu0 0.0
    %821 = vmatprep.subr.mxu0 0.0
    %822 = vmatpush1.msra.mxu0 0.0
    %823 = vmatprep.subr.mxu0 0.0
    %824 = vmatpush1.msra.mxu0 0.0
    %825 = vmatprep.subr.mxu0 0.0
    %826 = vmatpush1.msra.mxu0 0.0
    %827 = vmatprep.subr.mxu0 0.0
    %828 = vmatpush1.msra.mxu0 0.0
    %829 = vmatprep.subr.mxu0 0.0
    %830 = vmatpush1.msra.mxu0 0.0
    %831 = vmatprep.subr.mxu0 0.0
    %832 = vmatpush1.msra.mxu0 0.0
    %833 = vmatprep.subr.mxu0 0.0
    %834 = vmatpush1.msra.mxu0 0.0
    %835 = vmatprep.subr.mxu0 0.0
    %836 = vmatpush1.msra.mxu0 0.0
    %837 = vmatprep.subr.mxu0 0.0
    %838 = vmatpush1.msra.mxu0 0.0
    %839 = vmatprep.subr.mxu0 0.0
    %840 = vmatpush1.msra.mxu0 0.0
    %841 = vmatprep.subr.mxu0 0.0
    %842 = vmatpush1.msra.mxu0 0.0
    %843 = vmatprep.subr.mxu0 0.0
    %844 = vmatpush1.msra.mxu0 0.0
    %845 = vmatprep.subr.mxu0 0.0
    %846 = vmatpush1.msra.mxu0 0.0
    %847 = vmatprep.subr.mxu0 0.0
    %848 = vmatpush1.msra.mxu0 0.0
    %849 = vmatprep.subr.mxu0 0.0
    %850 = vmatpush1.msra.mxu0 0.0
    %851 = vmatprep.subr.mxu0 0.0
    %852 = vmatpush1.msra.mxu0 0.0
    %853 = vmatprep.subr.mxu0 0.0
    %854 = vmatpush1.msra.mxu0 0.0
    %855 = vmatprep.subr.mxu0 0.0
    %856 = vmatpush1.msra.mxu0 0.0
    %857 = vmatprep.subr.mxu0 0.0
    %858 = vmatpush1.msra.mxu0 0.0
    %859 = vmatprep.subr.mxu0 0.0
    %860 = vmatpush1.msra.mxu0 0.0
    %861 = vmatprep.subr.mxu0 0.0
    %862 = vmatpush1.msra.mxu0 0.0
    %863 = vmatprep.subr.mxu0 0.0
    %864 = vmatpush1.msra.mxu0 0.0
    %865 = vmatprep.subr.mxu0 0.0
    %866 = vmatpush1.msra.mxu0 0.0
    %867 = vmatprep.subr.mxu0 0.0
    %868 = vmatpush1.msra.mxu0 0.0
    %869 = vmatprep.subr.mxu0 0.0
    %870 = vmatpush1.msra.mxu0 0.0
    %871 = vmatprep.mubr.f32.mxu0 0.0
    %872 = vmatmul.mubr.f32.gmra.mrb[0].mxu0 %v805
    %v873 = vpop.f32.mrb[0].mxu0
    %v874 = vadd.f32 0.0, %v873
    %v875 = vpop.f32.mrb[0].mxu0
    %876 = vdwg.mxu0
    %877 = vrot.lane.b32.xlu0 %v128, 64
    %v878 = vpop.permute.xlu0 %877
    %879 = vrot.lane.b32.xlu0 %v130, 64
    %v880 = vpop.permute.xlu0 %879
    %v881 = vsel %vm54, %v878, 0
    %v883 = vsel %vm54, %v880, 0
    %885 = vmatprep.subr.mxu0 0.0
    %886 = vmatpush1.xpose.msra.mxu0 %v883
    %887 = vmatprep.subr.mxu0 0.0
    %888 = vmatpush1.xpose.msra.mxu0 0.0
    %889 = vmatprep.subr.mxu0 0.0
    %890 = vmatpush1.xpose.msra.mxu0 0.0
    %891 = vmatprep.subr.mxu0 0.0
    %892 = vmatpush1.xpose.msra.mxu0 0.0
    %893 = vmatprep.subr.mxu0 0.0
    %894 = vmatpush1.xpose.msra.mxu0 0.0
    %895 = vmatprep.subr.mxu0 0.0
    %896 = vmatpush1.xpose.msra.mxu0 0.0
    %897 = vmatprep.subr.mxu0 0.0
    %898 = vmatpush1.xpose.msra.mxu0 0.0
    %899 = vmatprep.subr.mxu0 0.0
    %900 = vmatpush1.xpose.msra.mxu0 0.0
    %901 = vmatprep.subr.mxu0 0.0
    %902 = vmatpush1.xpose.msra.mxu0 0.0
    %903 = vmatprep.subr.mxu0 0.0
    %904 = vmatpush1.xpose.msra.mxu0 0.0
    %905 = vmatprep.subr.mxu0 0.0
    %906 = vmatpush1.xpose.msra.mxu0 0.0
    %907 = vmatprep.subr.mxu0 0.0
    %908 = vmatpush1.xpose.msra.mxu0 0.0
    %909 = vmatprep.subr.mxu0 0.0
    %910 = vmatpush1.xpose.msra.mxu0 0.0
    %911 = vmatprep.subr.mxu0 0.0
    %912 = vmatpush1.xpose.msra.mxu0 0.0
    %913 = vmatprep.subr.mxu0 0.0
    %914 = vmatpush1.xpose.msra.mxu0 0.0
    %915 = vmatprep.subr.mxu0 0.0
    %916 = vmatpush1.xpose.msra.mxu0 0.0
    %917 = vmatprep.subr.mxu0 0.0
    %918 = vmatpush1.xpose.msra.mxu0 0.0
    %919 = vmatprep.subr.mxu0 0.0
    %920 = vmatpush1.xpose.msra.mxu0 0.0
    %921 = vmatprep.subr.mxu0 0.0
    %922 = vmatpush1.xpose.msra.mxu0 0.0
    %923 = vmatprep.subr.mxu0 0.0
    %924 = vmatpush1.xpose.msra.mxu0 0.0
    %925 = vmatprep.subr.mxu0 0.0
    %926 = vmatpush1.xpose.msra.mxu0 0.0
    %927 = vmatprep.subr.mxu0 0.0
    %928 = vmatpush1.xpose.msra.mxu0 0.0
    %929 = vmatprep.subr.mxu0 0.0
    %930 = vmatpush1.xpose.msra.mxu0 0.0
    %931 = vmatprep.subr.mxu0 0.0
    %932 = vmatpush1.xpose.msra.mxu0 0.0
    %933 = vmatprep.subr.mxu0 0.0
    %934 = vmatpush1.xpose.msra.mxu0 0.0
    %935 = vmatprep.subr.mxu0 0.0
    %936 = vmatpush1.xpose.msra.mxu0 0.0
    %937 = vmatprep.subr.mxu0 0.0
    %938 = vmatpush1.xpose.msra.mxu0 0.0
    %939 = vmatprep.subr.mxu0 0.0
    %940 = vmatpush1.xpose.msra.mxu0 0.0
    %941 = vmatprep.subr.mxu0 0.0
    %942 = vmatpush1.xpose.msra.mxu0 0.0
    %943 = vmatprep.subr.mxu0 0.0
    %944 = vmatpush1.xpose.msra.mxu0 0.0
    %945 = vmatprep.subr.mxu0 0.0
    %946 = vmatpush1.xpose.msra.mxu0 0.0
    %947 = vmatprep.subr.mxu0 0.0
    %948 = vmatpush1.xpose.msra.mxu0 0.0
    %949 = vmatprep.mubr.f32.mxu0 0.0
    %950 = vmatmul.mubr.f32.gmra.mrb[0].mxu0 %v881
    %v951 = vpop.f32.mrb[0].mxu0
    %v952 = vadd.f32 0.0, %v951
    %v953 = vpop.f32.mrb[0].mxu0
    %954 = vdwg.mxu0
    %955 = vrot.lane.b32.xlu0 %v134, 64
    %v956 = vpop.permute.xlu0 %955
    %957 = vrot.lane.b32.xlu0 %v136, 64
    %v958 = vpop.permute.xlu0 %957
    %v959 = vsel %vm54, %v956, 0
    %v961 = vsel %vm54, %v958, 0
    %963 = vmatprep.subr.mxu0 0.0
    %964 = vmatpush1.xpose.msra.mxu0 %v961
    %965 = vmatprep.subr.mxu0 0.0
    %966 = vmatpush1.xpose.msra.mxu0 0.0
    %967 = vmatprep.subr.mxu0 0.0
    %968 = vmatpush1.xpose.msra.mxu0 0.0
    %969 = vmatprep.subr.mxu0 0.0
    %970 = vmatpush1.xpose.msra.mxu0 0.0
    %971 = vmatprep.subr.mxu0 0.0
    %972 = vmatpush1.xpose.msra.mxu0 0.0
    %973 = vmatprep.subr.mxu0 0.0
    %974 = vmatpush1.xpose.msra.mxu0 0.0
    %975 = vmatprep.subr.mxu0 0.0
    %976 = vmatpush1.xpose.msra.mxu0 0.0
    %977 = vmatprep.subr.mxu0 0.0
    %978 = vmatpush1.xpose.msra.mxu0 0.0
    %979 = vmatprep.subr.mxu0 0.0
    %980 = vmatpush1.xpose.msra.mxu0 0.0
    %981 = vmatprep.subr.mxu0 0.0
    %982 = vmatpush1.xpose.msra.mxu0 0.0
    %983 = vmatprep.subr.mxu0 0.0
    %984 = vmatpush1.xpose.msra.mxu0 0.0
    %985 = vmatprep.subr.mxu0 0.0
    %986 = vmatpush1.xpose.msra.mxu0 0.0
    %987 = vmatprep.subr.mxu0 0.0
    %988 = vmatpush1.xpose.msra.mxu0 0.0
    %989 = vmatprep.subr.mxu0 0.0
    %990 = vmatpush1.xpose.msra.mxu0 0.0
    %991 = vmatprep.subr.mxu0 0.0
    %992 = vmatpush1.xpose.msra.mxu0 0.0
    %993 = vmatprep.subr.mxu0 0.0
    %994 = vmatpush1.xpose.msra.mxu0 0.0
    %995 = vmatprep.subr.mxu0 0.0
    %996 = vmatpush1.xpose.msra.mxu0 0.0
    %997 = vmatprep.subr.mxu0 0.0
    %998 = vmatpush1.xpose.msra.mxu0 0.0
    %999 = vmatprep.subr.mxu0 0.0
    %1000 = vmatpush1.xpose.msra.mxu0 0.0
    %1001 = vmatprep.subr.mxu0 0.0
    %1002 = vmatpush1.xpose.msra.mxu0 0.0
    %1003 = vmatprep.subr.mxu0 0.0
    %1004 = vmatpush1.xpose.msra.mxu0 0.0
    %1005 = vmatprep.subr.mxu0 0.0
    %1006 = vmatpush1.xpose.msra.mxu0 0.0
    %1007 = vmatprep.subr.mxu0 0.0
    %1008 = vmatpush1.xpose.msra.mxu0 0.0
    %1009 = vmatprep.subr.mxu0 0.0
    %1010 = vmatpush1.xpose.msra.mxu0 0.0
    %1011 = vmatprep.subr.mxu0 0.0
    %1012 = vmatpush1.xpose.msra.mxu0 0.0
    %1013 = vmatprep.subr.mxu0 0.0
    %1014 = vmatpush1.xpose.msra.mxu0 0.0
    %1015 = vmatprep.subr.mxu0 0.0
    %1016 = vmatpush1.xpose.msra.mxu0 0.0
    %1017 = vmatprep.subr.mxu0 0.0
    %1018 = vmatpush1.xpose.msra.mxu0 0.0
    %1019 = vmatprep.subr.mxu0 0.0
    %1020 = vmatpush1.xpose.msra.mxu0 0.0
    %1021 = vmatprep.subr.mxu0 0.0
    %1022 = vmatpush1.xpose.msra.mxu0 0.0
    %1023 = vmatprep.subr.mxu0 0.0
    %1024 = vmatpush1.xpose.msra.mxu0 0.0
    %1025 = vmatprep.subr.mxu0 0.0
    %1026 = vmatpush1.xpose.msra.mxu0 0.0
    %1027 = vmatprep.mubr.f32.mxu0 0.0
    %1028 = vmatmul.mubr.f32.gmra.mrb[0].mxu0 %v959
    %v1029 = vpop.f32.mrb[0].mxu0
    %v1030 = vadd.f32 0.0, %v1029
    %v1031 = vpop.f32.mrb[0].mxu0
    %1032 = vdwg.mxu0
    %v1033 = vsel %vm371, -1e+30, %v952
    %v1034 = vsel %vm371, -1e+30, %v1030
    %v1035 = vsel %vm374, %v1033, -inf
    %1036 = vmax.xlane.f32.xlu0 %v1035
    %v1037 = vpop.xlane.xlu0 %1036
    %v1038 = vsel %vm374, %v1034, -inf
    %1039 = vmax.xlane.f32.xlu0 %v1038
    %v1040 = vpop.xlane.xlu0 %1039
    %v1041 = vsub.f32 %v1033, %v1037
    %v1042 = vsub.f32 %v1034, %v1040
    %v1043 = vmul.f32 %v1041, 1.442695
    %v1044 = vpow.pop %v1043
    %v1045 = vmul.f32 %v1042, 1.442695
    %v1046 = vpow.pop %v1045
    %v1047 = vsel %vm374, %v1044, 0.0
    %1048 = vadd.xlane.f32.xlu0 %v1047
    %v1049 = vpop.xlane.xlu0 %1048
    %v1050 = vsel %vm374, %v1046, 0.0
    %1051 = vadd.xlane.f32.xlu0 %v1050
    %v1052 = vpop.xlane.xlu0 %1051
    %v1053 = vrcp.pop %v1049
    %v1054 = vrcp.pop %v1052
    %v1055 = vmul.f32 %v1044, %v1053
    %v1056 = vmul.f32 %v1046, %v1054
    %1057 = vrot.lane.b32.xlu0 %v205, 64
    %v1058 = vpop.permute.xlu0 %1057
    %v1061 = vsel %vm374, %v1055, 0
    %1063 = vmatprep.subr.mxu0 0.0
    %1064 = vmatpush1.msra.mxu0 %v1058
    %1065 = vmatprep.subr.mxu0 0.0
    %1066 = vmatpush1.msra.mxu0 0.0
    %1067 = vmatprep.subr.mxu0 0.0
    %1068 = vmatpush1.msra.mxu0 0.0
    %1069 = vmatprep.subr.mxu0 0.0
    %1070 = vmatpush1.msra.mxu0 0.0
    %1071 = vmatprep.subr.mxu0 0.0
    %1072 = vmatpush1.msra.mxu0 0.0
    %1073 = vmatprep.subr.mxu0 0.0
    %1074 = vmatpush1.msra.mxu0 0.0
    %1075 = vmatprep.subr.mxu0 0.0
    %1076 = vmatpush1.msra.mxu0 0.0
    %1077 = vmatprep.subr.mxu0 0.0
    %1078 = vmatpush1.msra.mxu0 0.0
    %1079 = vmatprep.subr.mxu0 0.0
    %1080 = vmatpush1.msra.mxu0 0.0
    %1081 = vmatprep.subr.mxu0 0.0
    %1082 = vmatpush1.msra.mxu0 0.0
    %1083 = vmatprep.subr.mxu0 0.0
    %1084 = vmatpush1.msra.mxu0 0.0
    %1085 = vmatprep.subr.mxu0 0.0
    %1086 = vmatpush1.msra.mxu0 0.0
    %1087 = vmatprep.subr.mxu0 0.0
    %1088 = vmatpush1.msra.mxu0 0.0
    %1089 = vmatprep.subr.mxu0 0.0
    %1090 = vmatpush1.msra.mxu0 0.0
    %1091 = vmatprep.subr.mxu0 0.0
    %1092 = vmatpush1.msra.mxu0 0.0
    %1093 = vmatprep.subr.mxu0 0.0
    %1094 = vmatpush1.msra.mxu0 0.0
    %1095 = vmatprep.subr.mxu0 0.0
    %1096 = vmatpush1.msra.mxu0 0.0
    %1097 = vmatprep.subr.mxu0 0.0
    %1098 = vmatpush1.msra.mxu0 0.0
    %1099 = vmatprep.subr.mxu0 0.0
    %1100 = vmatpush1.msra.mxu0 0.0
    %1101 = vmatprep.subr.mxu0 0.0
    %1102 = vmatpush1.msra.mxu0 0.0
    %1103 = vmatprep.subr.mxu0 0.0
    %1104 = vmatpush1.msra.mxu0 0.0
    %1105 = vmatprep.subr.mxu0 0.0
    %1106 = vmatpush1.msra.mxu0 0.0
    %1107 = vmatprep.subr.mxu0 0.0
    %1108 = vmatpush1.msra.mxu0 0.0
    %1109 = vmatprep.subr.mxu0 0.0
    %1110 = vmatpush1.msra.mxu0 0.0
    %1111 = vmatprep.subr.mxu0 0.0
    %1112 = vmatpush1.msra.mxu0 0.0
    %1113 = vmatprep.subr.mxu0 0.0
    %1114 = vmatpush1.msra.mxu0 0.0
    %1115 = vmatprep.subr.mxu0 0.0
    %1116 = vmatpush1.msra.mxu0 0.0
    %1117 = vmatprep.subr.mxu0 0.0
    %1118 = vmatpush1.msra.mxu0 0.0
    %1119 = vmatprep.subr.mxu0 0.0
    %1120 = vmatpush1.msra.mxu0 0.0
    %1121 = vmatprep.subr.mxu0 0.0
    %1122 = vmatpush1.msra.mxu0 0.0
    %1123 = vmatprep.subr.mxu0 0.0
    %1124 = vmatpush1.msra.mxu0 0.0
    %1125 = vmatprep.subr.mxu0 0.0
    %1126 = vmatpush1.msra.mxu0 0.0
    %1127 = vmatprep.mubr.f32.mxu0 0.0
    %1128 = vmatmul.mubr.f32.gmra.mrb[0].mxu0 %v1061
    %v1129 = vpop.f32.mrb[0].mxu0
    %v1130 = vadd.f32 0.0, %v1129
    %v1131 = vpop.f32.mrb[0].mxu0
    %1132 = vdwg.mxu0
    %1133 = vrot.lane.b32.xlu0 %v210, 64
    %v1134 = vpop.permute.xlu0 %1133
    %v1137 = vsel %vm374, %v1056, 0
    %1139 = vmatprep.subr.mxu0 0.0
    %1140 = vmatpush1.msra.mxu0 %v1134
    %1141 = vmatprep.subr.mxu0 0.0
    %1142 = vmatpush1.msra.mxu0 0.0
    %1143 = vmatprep.subr.mxu0 0.0
    %1144 = vmatpush1.msra.mxu0 0.0
    %1145 = vmatprep.subr.mxu0 0.0
    %1146 = vmatpush1.msra.mxu0 0.0
    %1147 = vmatprep.subr.mxu0 0.0
    %1148 = vmatpush1.msra.mxu0 0.0
    %1149 = vmatprep.subr.mxu0 0.0
    %1150 = vmatpush1.msra.mxu0 0.0
    %1151 = vmatprep.subr.mxu0 0.0
    %1152 = vmatpush1.msra.mxu0 0.0
    %1153 = vmatprep.subr.mxu0 0.0
    %1154 = vmatpush1.msra.mxu0 0.0
    %1155 = vmatprep.subr.mxu0 0.0
    %1156 = vmatpush1.msra.mxu0 0.0
    %1157 = vmatprep.subr.mxu0 0.0
    %1158 = vmatpush1.msra.mxu0 0.0
    %1159 = vmatprep.subr.mxu0 0.0
    %1160 = vmatpush1.msra.mxu0 0.0
    %1161 = vmatprep.subr.mxu0 0.0
    %1162 = vmatpush1.msra.mxu0 0.0
    %1163 = vmatprep.subr.mxu0 0.0
    %1164 = vmatpush1.msra.mxu0 0.0
    %1165 = vmatprep.subr.mxu0 0.0
    %1166 = vmatpush1.msra.mxu0 0.0
    %1167 = vmatprep.subr.mxu0 0.0
    %1168 = vmatpush1.msra.mxu0 0.0
    %1169 = vmatprep.subr.mxu0 0.0
    %1170 = vmatpush1.msra.mxu0 0.0
    %1171 = vmatprep.subr.mxu0 0.0
    %1172 = vmatpush1.msra.mxu0 0.0
    %1173 = vmatprep.subr.mxu0 0.0
    %1174 = vmatpush1.msra.mxu0 0.0
    %1175 = vmatprep.subr.mxu0 0.0
    %1176 = vmatpush1.msra.mxu0 0.0
    %1177 = vmatprep.subr.mxu0 0.0
    %1178 = vmatpush1.msra.mxu0 0.0
    %1179 = vmatprep.subr.mxu0 0.0
    %1180 = vmatpush1.msra.mxu0 0.0
    %1181 = vmatprep.subr.mxu0 0.0
    %1182 = vmatpush1.msra.mxu0 0.0
    %1183 = vmatprep.subr.mxu0 0.0
    %1184 = vmatpush1.msra.mxu0 0.0
    %1185 = vmatprep.subr.mxu0 0.0
    %1186 = vmatpush1.msra.mxu0 0.0
    %1187 = vmatprep.subr.mxu0 0.0
    %1188 = vmatpush1.msra.mxu0 0.0
    %1189 = vmatprep.subr.mxu0 0.0
    %1190 = vmatpush1.msra.mxu0 0.0
    %1191 = vmatprep.subr.mxu0 0.0
    %1192 = vmatpush1.msra.mxu0 0.0
    %1193 = vmatprep.subr.mxu0 0.0
    %1194 = vmatpush1.msra.mxu0 0.0
    %1195 = vmatprep.subr.mxu0 0.0
    %1196 = vmatpush1.msra.mxu0 0.0
    %1197 = vmatprep.subr.mxu0 0.0
    %1198 = vmatpush1.msra.mxu0 0.0
    %1199 = vmatprep.subr.mxu0 0.0
    %1200 = vmatpush1.msra.mxu0 0.0
    %1201 = vmatprep.subr.mxu0 0.0
    %1202 = vmatpush1.msra.mxu0 0.0
    %1203 = vmatprep.mubr.f32.mxu0 0.0
    %1204 = vmatmul.mubr.f32.gmra.mrb[0].mxu0 %v1137
    %v1205 = vpop.f32.mrb[0].mxu0
    %v1206 = vadd.f32 0.0, %v1205
    %v1207 = vpop.f32.mrb[0].mxu0
    %1208 = vdwg.mxu0
    %1209 = vrot.lane.b32.xlu0 %v128, 32
    %v1210 = vpop.permute.xlu0 %1209
    %1211 = vrot.lane.b32.xlu0 %v130, 32
    %v1212 = vpop.permute.xlu0 %1211
    %v1213 = vsel %vm54, %v1210, 0
    %v1215 = vsel %vm54, %v1212, 0
    %1217 = vmatprep.subr.mxu0 0.0
    %1218 = vmatpush1.xpose.msra.mxu0 %v1215
    %1219 = vmatprep.subr.mxu0 0.0
    %1220 = vmatpush1.xpose.msra.mxu0 0.0
    %1221 = vmatprep.subr.mxu0 0.0
    %1222 = vmatpush1.xpose.msra.mxu0 0.0
    %1223 = vmatprep.subr.mxu0 0.0
    %1224 = vmatpush1.xpose.msra.mxu0 0.0
    %1225 = vmatprep.subr.mxu0 0.0
    %1226 = vmatpush1.xpose.msra.mxu0 0.0
    %1227 = vmatprep.subr.mxu0 0.0
    %1228 = vmatpush1.xpose.msra.mxu0 0.0
    %1229 = vmatprep.subr.mxu0 0.0
    %1230 = vmatpush1.xpose.msra.mxu0 0.0
    %1231 = vmatprep.subr.mxu0 0.0
    %1232 = vmatpush1.xpose.msra.mxu0 0.0
    %1233 = vmatprep.subr.mxu0 0.0
    %1234 = vmatpush1.xpose.msra.mxu0 0.0
    %1235 = vmatprep.subr.mxu0 0.0
    %1236 = vmatpush1.xpose.msra.mxu0 0.0
    %1237 = vmatprep.subr.mxu0 0.0
    %1238 = vmatpush1.xpose.msra.mxu0 0.0
    %1239 = vmatprep.subr.mxu0 0.0
    %1240 = vmatpush1.xpose.msra.mxu0 0.0
    %1241 = vmatprep.subr.mxu0 0.0
    %1242 = vmatpush1.xpose.msra.mxu0 0.0
    %1243 = vmatprep.subr.mxu0 0.0
    %1244 = vmatpush1.xpose.msra.mxu0 0.0
    %1245 = vmatprep.subr.mxu0 0.0
    %1246 = vmatpush1.xpose.msra.mxu0 0.0
    %1247 = vmatprep.subr.mxu0 0.0
    %1248 = vmatpush1.xpose.msra.mxu0 0.0
    %1249 = vmatprep.subr.mxu0 0.0
    %1250 = vmatpush1.xpose.msra.mxu0 0.0
    %1251 = vmatprep.subr.mxu0 0.0
    %1252 = vmatpush1.xpose.msra.mxu0 0.0
    %1253 = vmatprep.subr.mxu0 0.0
    %1254 = vmatpush1.xpose.msra.mxu0 0.0
    %1255 = vmatprep.subr.mxu0 0.0
    %1256 = vmatpush1.xpose.msra.mxu0 0.0
    %1257 = vmatprep.subr.mxu0 0.0
    %1258 = vmatpush1.xpose.msra.mxu0 0.0
    %1259 = vmatprep.subr.mxu0 0.0
    %1260 = vmatpush1.xpose.msra.mxu0 0.0
    %1261 = vmatprep.subr.mxu0 0.0
    %1262 = vmatpush1.xpose.msra.mxu0 0.0
    %1263 = vmatprep.subr.mxu0 0.0
    %1264 = vmatpush1.xpose.msra.mxu0 0.0
    %1265 = vmatprep.subr.mxu0 0.0
    %1266 = vmatpush1.xpose.msra.mxu0 0.0
    %1267 = vmatprep.subr.mxu0 0.0
    %1268 = vmatpush1.xpose.msra.mxu0 0.0
    %1269 = vmatprep.subr.mxu0 0.0
    %1270 = vmatpush1.xpose.msra.mxu0 0.0
    %1271 = vmatprep.subr.mxu0 0.0
    %1272 = vmatpush1.xpose.msra.mxu0 0.0
    %1273 = vmatprep.subr.mxu0 0.0
    %1274 = vmatpush1.xpose.msra.mxu0 0.0
    %1275 = vmatprep.subr.mxu0 0.0
    %1276 = vmatpush1.xpose.msra.mxu0 0.0
    %1277 = vmatprep.subr.mxu0 0.0
    %1278 = vmatpush1.xpose.msra.mxu0 0.0
    %1279 = vmatprep.subr.mxu0 0.0
    %1280 = vmatpush1.xpose.msra.mxu0 0.0
    %1281 = vmatprep.mubr.f32.mxu0 0.0
    %1282 = vmatmul.mubr.f32.gmra.mrb[0].mxu0 %v1213
    %v1283 = vpop.f32.mrb[0].mxu0
    %v1284 = vadd.f32 0.0, %v1283
    %v1285 = vpop.f32.mrb[0].mxu0
    %1286 = vdwg.mxu0
    %1287 = vrot.lane.b32.xlu0 %v134, 32
    %v1288 = vpop.permute.xlu0 %1287
    %1289 = vrot.lane.b32.xlu0 %v136, 32
    %v1290 = vpop.permute.xlu0 %1289
    %v1291 = vsel %vm54, %v1288, 0
    %v1293 = vsel %vm54, %v1290, 0
    %1295 = vmatprep.subr.mxu0 0.0
    %1296 = vmatpush1.xpose.msra.mxu0 %v1293
    %1297 = vmatprep.subr.mxu0 0.0
    %1298 = vmatpush1.xpose.msra.mxu0 0.0
    %1299 = vmatprep.subr.mxu0 0.0
    %1300 = vmatpush1.xpose.msra.mxu0 0.0
    %1301 = vmatprep.subr.mxu0 0.0
    %1302 = vmatpush1.xpose.msra.mxu0 0.0
    %1303 = vmatprep.subr.mxu0 0.0
    %1304 = vmatpush1.xpose.msra.mxu0 0.0
    %1305 = vmatprep.subr.mxu0 0.0
    %1306 = vmatpush1.xpose.msra.mxu0 0.0
    %1307 = vmatprep.subr.mxu0 0.0
    %1308 = vmatpush1.xpose.msra.mxu0 0.0
    %1309 = vmatprep.subr.mxu0 0.0
    %1310 = vmatpush1.xpose.msra.mxu0 0.0
    %1311 = vmatprep.subr.mxu0 0.0
    %1312 = vmatpush1.xpose.msra.mxu0 0.0
    %1313 = vmatprep.subr.mxu0 0.0
    %1314 = vmatpush1.xpose.msra.mxu0 0.0
    %1315 = vmatprep.subr.mxu0 0.0
    %1316 = vmatpush1.xpose.msra.mxu0 0.0
    %1317 = vmatprep.subr.mxu0 0.0
    %1318 = vmatpush1.xpose.msra.mxu0 0.0
    %1319 = vmatprep.subr.mxu0 0.0
    %1320 = vmatpush1.xpose.msra.mxu0 0.0
    %1321 = vmatprep.subr.mxu0 0.0
    %1322 = vmatpush1.xpose.msra.mxu0 0.0
    %1323 = vmatprep.subr.mxu0 0.0
    %1324 = vmatpush1.xpose.msra.mxu0 0.0
    %1325 = vmatprep.subr.mxu0 0.0
    %1326 = vmatpush1.xpose.msra.mxu0 0.0
    %1327 = vmatprep.subr.mxu0 0.0
    %1328 = vmatpush1.xpose.msra.mxu0 0.0
    %1329 = vmatprep.subr.mxu0 0.0
    %1330 = vmatpush1.xpose.msra.mxu0 0.0
    %1331 = vmatprep.subr.mxu0 0.0
    %1332 = vmatpush1.xpose.msra.mxu0 0.0
    %1333 = vmatprep.subr.mxu0 0.0
    %1334 = vmatpush1.xpose.msra.mxu0 0.0
    %1335 = vmatprep.subr.mxu0 0.0
    %1336 = vmatpush1.xpose.msra.mxu0 0.0
    %1337 = vmatprep.subr.mxu0 0.0
    %1338 = vmatpush1.xpose.msra.mxu0 0.0
    %1339 = vmatprep.subr.mxu0 0.0
    %1340 = vmatpush1.xpose.msra.mxu0 0.0
    %1341 = vmatprep.subr.mxu0 0.0
    %1342 = vmatpush1.xpose.msra.mxu0 0.0
    %1343 = vmatprep.subr.mxu0 0.0
    %1344 = vmatpush1.xpose.msra.mxu0 0.0
    %1345 = vmatprep.subr.mxu0 0.0
    %1346 = vmatpush1.xpose.msra.mxu0 0.0
    %1347 = vmatprep.subr.mxu0 0.0
    %1348 = vmatpush1.xpose.msra.mxu0 0.0
    %1349 = vmatprep.subr.mxu0 0.0
    %1350 = vmatpush1.xpose.msra.mxu0 0.0
    %1351 = vmatprep.subr.mxu0 0.0
    %1352 = vmatpush1.xpose.msra.mxu0 0.0
    %1353 = vmatprep.subr.mxu0 0.0
    %1354 = vmatpush1.xpose.msra.mxu0 0.0
    %1355 = vmatprep.subr.mxu0 0.0
    %1356 = vmatpush1.xpose.msra.mxu0 0.0
    %1357 = vmatprep.subr.mxu0 0.0
    %1358 = vmatpush1.xpose.msra.mxu0 0.0
    %1359 = vmatprep.mubr.f32.mxu0 0.0
    %1360 = vmatmul.mubr.f32.gmra.mrb[0].mxu0 %v1291
    %v1361 = vpop.f32.mrb[0].mxu0
    %v1362 = vadd.f32 0.0, %v1361
    %v1363 = vpop.f32.mrb[0].mxu0
    %1364 = vdwg.mxu0
    %v1365 = vsel %vm371, -1e+30, %v1284
    %v1366 = vsel %vm371, -1e+30, %v1362
    %v1367 = vsel %vm374, %v1365, -inf
    %1368 = vmax.xlane.f32.xlu0 %v1367
    %v1369 = vpop.xlane.xlu0 %1368
    %v1370 = vsel %vm374, %v1366, -inf
    %1371 = vmax.xlane.f32.xlu0 %v1370
    %v1372 = vpop.xlane.xlu0 %1371
    %v1373 = vsub.f32 %v1365, %v1369
    %v1374 = vsub.f32 %v1366, %v1372
    %v1375 = vmul.f32 %v1373, 1.442695
    %v1376 = vpow.pop %v1375
    %v1377 = vmul.f32 %v1374, 1.442695
    %v1378 = vpow.pop %v1377
    %v1379 = vsel %vm374, %v1376, 0.0
    %1380 = vadd.xlane.f32.xlu0 %v1379
    %v1381 = vpop.xlane.xlu0 %1380
    %v1382 = vsel %vm374, %v1378, 0.0
    %1383 = vadd.xlane.f32.xlu0 %v1382
    %v1384 = vpop.xlane.xlu0 %1383
    %v1385 = vrcp.pop %v1381
    %v1386 = vrcp.pop %v1384
    %v1387 = vmul.f32 %v1376, %v1385
    %v1388 = vmul.f32 %v1378, %v1386
    %1389 = vrot.lane.b32.xlu0 %v205, 32
    %v1390 = vpop.permute.xlu0 %1389
    %v1393 = vsel %vm374, %v1387, 0
    %1395 = vmatprep.subr.mxu0 0.0
    %1396 = vmatpush1.msra.mxu0 %v1390
    %1397 = vmatprep.subr.mxu0 0.0
    %1398 = vmatpush1.msra.mxu0 0.0
    %1399 = vmatprep.subr.mxu0 0.0
    %1400 = vmatpush1.msra.mxu0 0.0
    %1401 = vmatprep.subr.mxu0 0.0
    %1402 = vmatpush1.msra.mxu0 0.0
    %1403 = vmatprep.subr.mxu0 0.0
    %1404 = vmatpush1.msra.mxu0 0.0
    %1405 = vmatprep.subr.mxu0 0.0
    %1406 = vmatpush1.msra.mxu0 0.0
    %1407 = vmatprep.subr.mxu0 0.0
    %1408 = vmatpush1.msra.mxu0 0.0
    %1409 = vmatprep.subr.mxu0 0.0
    %1410 = vmatpush1.msra.mxu0 0.0
    %1411 = vmatprep.subr.mxu0 0.0
    %1412 = vmatpush1.msra.mxu0 0.0
    %1413 = vmatprep.subr.mxu0 0.0
    %1414 = vmatpush1.msra.mxu0 0.0
    %1415 = vmatprep.subr.mxu0 0.0
    %1416 = vmatpush1.msra.mxu0 0.0
    %1417 = vmatprep.subr.mxu0 0.0
    %1418 = vmatpush1.msra.mxu0 0.0
    %1419 = vmatprep.subr.mxu0 0.0
    %1420 = vmatpush1.msra.mxu0 0.0
    %1421 = vmatprep.subr.mxu0 0.0
    %1422 = vmatpush1.msra.mxu0 0.0
    %1423 = vmatprep.subr.mxu0 0.0
    %1424 = vmatpush1.msra.mxu0 0.0
    %1425 = vmatprep.subr.mxu0 0.0
    %1426 = vmatpush1.msra.mxu0 0.0
    %1427 = vmatprep.subr.mxu0 0.0
    %1428 = vmatpush1.msra.mxu0 0.0
    %1429 = vmatprep.subr.mxu0 0.0
    %1430 = vmatpush1.msra.mxu0 0.0
    %1431 = vmatprep.subr.mxu0 0.0
    %1432 = vmatpush1.msra.mxu0 0.0
    %1433 = vmatprep.subr.mxu0 0.0
    %1434 = vmatpush1.msra.mxu0 0.0
    %1435 = vmatprep.subr.mxu0 0.0
    %1436 = vmatpush1.msra.mxu0 0.0
    %1437 = vmatprep.subr.mxu0 0.0
    %1438 = vmatpush1.msra.mxu0 0.0
    %1439 = vmatprep.subr.mxu0 0.0
    %1440 = vmatpush1.msra.mxu0 0.0
    %1441 = vmatprep.subr.mxu0 0.0
    %1442 = vmatpush1.msra.mxu0 0.0
    %1443 = vmatprep.subr.mxu0 0.0
    %1444 = vmatpush1.msra.mxu0 0.0
    %1445 = vmatprep.subr.mxu0 0.0
    %1446 = vmatpush1.msra.mxu0 0.0
    %1447 = vmatprep.subr.mxu0 0.0
    %1448 = vmatpush1.msra.mxu0 0.0
    %1449 = vmatprep.subr.mxu0 0.0
    %1450 = vmatpush1.msra.mxu0 0.0
    %1451 = vmatprep.subr.mxu0 0.0
    %1452 = vmatpush1.msra.mxu0 0.0
    %1453 = vmatprep.subr.mxu0 0.0
    %1454 = vmatpush1.msra.mxu0 0.0
    %1455 = vmatprep.subr.mxu0 0.0
    %1456 = vmatpush1.msra.mxu0 0.0
    %1457 = vmatprep.subr.mxu0 0.0
    %1458 = vmatpush1.msra.mxu0 0.0
    %1459 = vmatprep.mubr.f32.mxu0 0.0
    %1460 = vmatmul.mubr.f32.gmra.mrb[0].mxu0 %v1393
    %v1461 = vpop.f32.mrb[0].mxu0
    %v1462 = vadd.f32 0.0, %v1461
    %v1463 = vpop.f32.mrb[0].mxu0
    %1464 = vdwg.mxu0
    %1465 = vrot.lane.b32.xlu0 %v210, 32
    %v1466 = vpop.permute.xlu0 %1465
    %v1469 = vsel %vm374, %v1388, 0
    %1471 = vmatprep.subr.mxu0 0.0
    %1472 = vmatpush1.msra.mxu0 %v1466
    %1473 = vmatprep.subr.mxu0 0.0
    %1474 = vmatpush1.msra.mxu0 0.0
    %1475 = vmatprep.subr.mxu0 0.0
    %1476 = vmatpush1.msra.mxu0 0.0
    %1477 = vmatprep.subr.mxu0 0.0
    %1478 = vmatpush1.msra.mxu0 0.0
    %1479 = vmatprep.subr.mxu0 0.0
    %1480 = vmatpush1.msra.mxu0 0.0
    %1481 = vmatprep.subr.mxu0 0.0
    %1482 = vmatpush1.msra.mxu0 0.0
    %1483 = vmatprep.subr.mxu0 0.0
    %1484 = vmatpush1.msra.mxu0 0.0
    %1485 = vmatprep.subr.mxu0 0.0
    %1486 = vmatpush1.msra.mxu0 0.0
    %1487 = vmatprep.subr.mxu0 0.0
    %1488 = vmatpush1.msra.mxu0 0.0
    %1489 = vmatprep.subr.mxu0 0.0
    %1490 = vmatpush1.msra.mxu0 0.0
    %1491 = vmatprep.subr.mxu0 0.0
    %1492 = vmatpush1.msra.mxu0 0.0
    %1493 = vmatprep.subr.mxu0 0.0
    %1494 = vmatpush1.msra.mxu0 0.0
    %1495 = vmatprep.subr.mxu0 0.0
    %1496 = vmatpush1.msra.mxu0 0.0
    %1497 = vmatprep.subr.mxu0 0.0
    %1498 = vmatpush1.msra.mxu0 0.0
    %1499 = vmatprep.subr.mxu0 0.0
    %1500 = vmatpush1.msra.mxu0 0.0
    %1501 = vmatprep.subr.mxu0 0.0
    %1502 = vmatpush1.msra.mxu0 0.0
    %1503 = vmatprep.subr.mxu0 0.0
    %1504 = vmatpush1.msra.mxu0 0.0
    %1505 = vmatprep.subr.mxu0 0.0
    %1506 = vmatpush1.msra.mxu0 0.0
    %1507 = vmatprep.subr.mxu0 0.0
    %1508 = vmatpush1.msra.mxu0 0.0
    %1509 = vmatprep.subr.mxu0 0.0
    %1510 = vmatpush1.msra.mxu0 0.0
    %1511 = vmatprep.subr.mxu0 0.0
    %1512 = vmatpush1.msra.mxu0 0.0
    %1513 = vmatprep.subr.mxu0 0.0
    %1514 = vmatpush1.msra.mxu0 0.0
    %1515 = vmatprep.subr.mxu0 0.0
    %1516 = vmatpush1.msra.mxu0 0.0
    %1517 = vmatprep.subr.mxu0 0.0
    %1518 = vmatpush1.msra.mxu0 0.0
    %1519 = vmatprep.subr.mxu0 0.0
    %1520 = vmatpush1.msra.mxu0 0.0
    %1521 = vmatprep.subr.mxu0 0.0
    %1522 = vmatpush1.msra.mxu0 0.0
    %1523 = vmatprep.subr.mxu0 0.0
    %1524 = vmatpush1.msra.mxu0 0.0
    %1525 = vmatprep.subr.mxu0 0.0
    %1526 = vmatpush1.msra.mxu0 0.0
    %1527 = vmatprep.subr.mxu0 0.0
    %1528 = vmatpush1.msra.mxu0 0.0
    %1529 = vmatprep.subr.mxu0 0.0
    %1530 = vmatpush1.msra.mxu0 0.0
    %1531 = vmatprep.subr.mxu0 0.0
    %1532 = vmatpush1.msra.mxu0 0.0
    %1533 = vmatprep.subr.mxu0 0.0
    %1534 = vmatpush1.msra.mxu0 0.0
    %1535 = vmatprep.mubr.f32.mxu0 0.0
    %1536 = vmatmul.mubr.f32.gmra.mrb[0].mxu0 %v1469
    %v1537 = vpop.f32.mrb[0].mxu0
    %v1538 = vadd.f32 0.0, %v1537
    %v1539 = vpop.f32.mrb[0].mxu0
    %1540 = vdwg.mxu0
    %1543 = vrot.lane.b32.xlu0 %v797, 32
    %v1544 = vpop.permute.xlu0 %1543
    %1545 = vrot.lane.b32.xlu0 %v874, 32
    %v1546 = vpop.permute.xlu0 %1545
    %1551 = vrot.lane.b32.xlu0 %v1130, 64
    %v1552 = vpop.permute.xlu0 %1551
    %1553 = vrot.lane.b32.xlu0 %v1206, 64
    %v1554 = vpop.permute.xlu0 %1553
    %1559 = vrot.lane.b32.xlu0 %v1462, 96
    %v1560 = vpop.permute.xlu0 %1559
    %1561 = vrot.lane.b32.xlu0 %v1538, 96
    %v1562 = vpop.permute.xlu0 %1561
    %v1565 = vsel %vm54, %v467, %v1544
    %v1566 = vsel %vm54, %v540, %v1546
    %vm1567 = vcmask 523264
    %v1568 = vsel %vm1567, %v1565, %v1552
    %v1569 = vsel %vm1567, %v1566, %v1554
    %vm1570 = vcmask 785408
    %v1571 = vsel %vm1570, %v1568, %v1560
    %v1572 = vsel %vm1570, %v1569, %v1562
    %1573 = vst [vmem:[#allocation7] sm:$0xff] %v1571
    %1574 = vst [vmem:[#allocation7 + $0x8] sm:$0xff] %v1572
    // Predicated region
    $region18: #{tpu_custom_call.1} parent=1 // pred_check
      _
    $region19: #{tpu_custom_call.1} parent=1 // pred_check_branch
      %1576 = sbr.rel (0) target = $region21
    $region20: #{tpu_custom_call.1} parent=1 // pred_region
      %s1578 = ssub.s32 256, 256
      %1579 = vsyncadd [#allocation4], %s1578
      %s1580 = sshll.u32 [#allocation7], 4
      %s1581 = int_to_ptr.vmem [resolvable:$true] %s1580
      %1586 = dma.vmem_to_hbm [thread:$0]  %s1581, 256, %s2, [#allocation4], 128, 128, 8
    $region21: #{tpu_custom_call.1} parent=1 // pred_fallthru
      _
    // Predicated region
    $region22: #{tpu_custom_call.1} parent=1 // pred_check
      _
    $region23: #{tpu_custom_call.1} parent=1 // pred_check_branch
      %1588 = sbr.rel (0) target = $region25
    $region24: #{tpu_custom_call.1} parent=1 // pred_region
      %1589 = dma.done [#allocation4], 256
    $region25: #{tpu_custom_call.1} parent=1 // pred_fallthru
      _
    %1590 = vsyncpa [#allocation3], 1
    %1591 = vsyncpa [#allocation6], 1
    %1592 = vsyncpa [#allocation4], 1

</llo_original>
